<compile_context>
chip_gen: v5e
topology: v5e:2x2
jax: 0.10.0
libtpu: 0.0.40
codegen_flags: <defaults>
</compile_context>

<pallas_src>
import jax
import jax.numpy as jnp
from jax import lax
from jax.experimental import pallas as pl
from jax.experimental.pallas import tpu as pltpu

HID = 768
B = 4            # nn.LayerNorm([4, ...]) hard-codes batch = 4
SEQ = 8          # bert token length
T_AUDIO = 8      # hubert frames
FRAME = 40       # audio samples per hubert frame
VOCAB = 1000
LN_EPS = 1e-5
OUT_PAD = 128    # lane-dense output width (real output is column 0)


# ----------------------------------------------------------------------------
# Pallas kernel: fused stub projections + classifier head
# ----------------------------------------------------------------------------
def head_kernel(tok_ref, frm_ref,
                bpw_ref, bpb_ref,            # bert pooler   (768,768), (1,768)
                hpw_ref, hpb_ref,            # hubert proj   (40,768),  (1,768)
                g1a_ref, b1a_ref,            # LN1 bert half (4,768)
                g1b_ref, b1b_ref,            # LN1 hub  half (4,768)
                w1a_ref, w1b_ref, b1_ref,    # linear1 split (768,32)x2, (1,32)
                g2_ref, beta2_ref,           # LN2           (4,32)
                w2_ref, b2_ref,              # linear2       (1,32), (1,1)
                out_ref):
    # fused BERT pooler: tanh(pooled_tok @ W + b)            -> (B, 768)
    bert_pooled = jnp.tanh(
        jnp.dot(tok_ref[...], bpw_ref[...], preferred_element_type=jnp.float32)
        + bpb_ref[...])

    # fused HuBERT projection on pre-mean-pooled frames (affine => exact
    # commutation with the time mean)                        -> (B, 768)
    hub_pooled = (jnp.dot(frm_ref[...], hpw_ref[...],
                          preferred_element_type=jnp.float32) + hpb_ref[...])

    # nn.LayerNorm([4, 1536]) over the whole virtual concat, one-pass stats,
    # without materializing the (4,1536) concat.
    n1 = jnp.float32(B * 2 * HID)
    s1 = jnp.sum(bert_pooled) + jnp.sum(hub_pooled)
    sq1 = jnp.sum(bert_pooled * bert_pooled) + jnp.sum(hub_pooled * hub_pooled)
    mu1 = s1 / n1
    var1 = sq1 / n1 - mu1 * mu1
    inv1 = lax.rsqrt(var1 + LN_EPS)
    xa = (bert_pooled - mu1) * inv1 * g1a_ref[...] + b1a_ref[...]
    xb = (hub_pooled - mu1) * inv1 * g1b_ref[...] + b1b_ref[...]

    # dropout -> identity (eval); linear1 split across the two halves; relu
    z = (jnp.dot(xa, w1a_ref[...], preferred_element_type=jnp.float32)
         + jnp.dot(xb, w1b_ref[...], preferred_element_type=jnp.float32)
         + b1_ref[...])
    z = jnp.maximum(z, 0.0)                                   # (B, 32)

    # nn.LayerNorm([4, 32]) whole-tensor, one-pass stats (f32 throughout)
    n2 = jnp.float32(B * 32)
    mu2 = jnp.sum(z) / n2
    var2 = jnp.sum(z * z) / n2 - mu2 * mu2
    x2 = (z - mu2) * lax.rsqrt(var2 + LN_EPS) * g2_ref[...] + beta2_ref[...]

    # linear2 (32 -> 1) as VPU multiply + lane reduce (no 1-wide MXU op),
    # tanh, * 2.5.  Broadcast to a lane-dense (B, 128) output slab.
    y = jnp.sum(x2 * w2_ref[...], axis=-1, keepdims=True) + b2_ref[...]  # (B,1)
    out_ref[...] = jnp.broadcast_to(jnp.tanh(y) * 2.5, (B, OUT_PAD))


def head_forward(pooled_tok, mean_frames, params):
    w1 = params["w1"]
    args = (pooled_tok, mean_frames,
            params["bert_pool_w"], params["bert_pool_b"].reshape(1, HID),
            params["hub_proj_w"],  params["hub_proj_b"].reshape(1, HID),
            params["ln1_g"][:, :HID], params["ln1_b"][:, :HID],
            params["ln1_g"][:, HID:], params["ln1_b"][:, HID:],
            w1[:HID, :], w1[HID:, :], params["b1"],
            params["ln2_g"], params["ln2_b"],
            params["w2"].T, params["b2"])

    vmem = pl.BlockSpec(memory_space=pltpu.MemorySpace.VMEM)
    out = pl.pallas_call(
        head_kernel,
        out_shape=jax.ShapeDtypeStruct((B, OUT_PAD), jnp.float32),
        in_specs=[vmem] * len(args),
        out_specs=vmem,
    )(*args)
    return out[:, :1]                                         # (B, 1)


# ----------------------------------------------------------------------------
# Full forward (stub encoders + fused head), one jit
# ----------------------------------------------------------------------------
@jax.jit
def custom_multi_model_simple_pooled(input_values, input_id, mask, params):
    # TODO(synk): full pretrained 'bert-base-cased' transformer stack not
    # translated; stubbed as embedding lookup + masked mean.  The data-
    # dependent gather stays in XLA; the pooler matmul+tanh runs in-kernel.
    emb = params["bert_emb"][input_id]                        # (B, SEQ, 768)
    m = mask[..., None].astype(jnp.float32)
    pooled_tok = (jnp.sum(emb * m, axis=1)
                  / jnp.maximum(jnp.sum(m, axis=1), 1.0))     # (B, 768)

    # TODO(synk): full pretrained 'facebook/hubert-base-ls960' conv/transformer
    # stack not translated; stubbed as a frame-wise linear projection.  Since
    # the stub is affine, the time-mean commutes with it exactly, so only the
    # (B, FRAME) mean frame enters the kernel.
    mean_frames = input_values.reshape(B, T_AUDIO, FRAME).mean(axis=1)  # (B, 40)

    return head_forward(pooled_tok, mean_frames, params)      # (B, 1)


# ----------------------------------------------------------------------------
# Deterministic parameter initialization (PyTorch-shaped head params)
# ----------------------------------------------------------------------------
def init_params(key):
    ks = jax.random.split(key, 8)

    def uniform_linear(k, fan_in, shape):
        bound = 1.0 / jnp.sqrt(fan_in)
        return jax.random.uniform(k, shape, jnp.float32, -bound, bound)

    return {
        # stub encoder params
        "bert_emb":    jax.random.normal(ks[0], (VOCAB, HID), jnp.float32) * 0.02,
        "bert_pool_w": jax.random.normal(ks[1], (HID, HID), jnp.float32) * 0.02,
        "bert_pool_b": jnp.zeros((HID,), jnp.float32),
        "hub_proj_w":  jax.random.normal(ks[2], (FRAME, HID), jnp.float32) * 0.02,
        "hub_proj_b":  jnp.zeros((HID,), jnp.float32),
        # head params (same shapes as the PyTorch module)
        "ln1_g": jnp.ones((B, 2 * HID), jnp.float32),
        "ln1_b": jnp.zeros((B, 2 * HID), jnp.float32),
        "w1":    uniform_linear(ks[3], 2 * HID, (2 * HID, 32)),
        "b1":    uniform_linear(ks[4], 2 * HID, (1, 32)),
        "ln2_g": jnp.ones((B, 32), jnp.float32),
        "ln2_b": jnp.zeros((B, 32), jnp.float32),
        "w2":    uniform_linear(ks[5], 32, (32, 1)),
        "b2":    uniform_linear(ks[6], 32, (1, 1)),
    }


if __name__ == "__main__":
    key = jax.random.PRNGKey(0)
    k_in, k_id, k_par = jax.random.split(key, 3)

    input_values = jax.random.normal(k_in, (B, T_AUDIO * FRAME), jnp.float32)
    input_id = jax.random.randint(k_id, (B, SEQ), 0, VOCAB, jnp.int32)
    mask = jnp.ones((B, SEQ), jnp.int32)

    params = init_params(k_par)

    out = custom_multi_model_simple_pooled(input_values, input_id, mask, params)
    out = jax.block_until_ready(out)
    assert out.shape == (B, 1) and out.dtype == jnp.float32
    assert bool(jnp.all(jnp.isfinite(out)))
    print("KERNEL_OK")
</pallas_src>

<mosaic_0001>
module attributes {stable_mosaic.version = 11 : i64} {
  func.func @head_kernel(%arg0: memref<4x768xf32, #tpu.memory_space<vmem>>, %arg1: memref<4x40xf32, #tpu.memory_space<vmem>>, %arg2: memref<768x768xf32, #tpu.memory_space<vmem>>, %arg3: memref<1x768xf32, #tpu.memory_space<vmem>>, %arg4: memref<40x768xf32, #tpu.memory_space<vmem>>, %arg5: memref<1x768xf32, #tpu.memory_space<vmem>>, %arg6: memref<4x768xf32, #tpu.memory_space<vmem>>, %arg7: memref<4x768xf32, #tpu.memory_space<vmem>>, %arg8: memref<4x768xf32, #tpu.memory_space<vmem>>, %arg9: memref<4x768xf32, #tpu.memory_space<vmem>>, %arg10: memref<768x32xf32, #tpu.memory_space<vmem>>, %arg11: memref<768x32xf32, #tpu.memory_space<vmem>>, %arg12: memref<1x32xf32, #tpu.memory_space<vmem>>, %arg13: memref<4x32xf32, #tpu.memory_space<vmem>>, %arg14: memref<4x32xf32, #tpu.memory_space<vmem>>, %arg15: memref<1x32xf32, #tpu.memory_space<vmem>>, %arg16: memref<1x1xf32, #tpu.memory_space<vmem>>, %arg17: memref<4x128xf32, #tpu.memory_space<vmem>>) attributes {dimension_semantics = [], scalar_prefetch = 0 : i64, scratch_operands = 0 : i64, tpu.core_type = #tpu.core_type<tc>} {
    %c0 = arith.constant 0 : index
    %c0_0 = arith.constant 0 : index
    %0 = vector.load %arg0[%c0, %c0_0] : memref<4x768xf32, #tpu.memory_space<vmem>>, vector<4x768xf32>
    %c0_1 = arith.constant 0 : index
    %c0_2 = arith.constant 0 : index
    %1 = vector.load %arg2[%c0_1, %c0_2] : memref<768x768xf32, #tpu.memory_space<vmem>>, vector<768x768xf32>
    %cst = arith.constant dense<0.000000e+00> : vector<4x768xf32>
    %2 = tpu.matmul %0, %1, %cst {dimension_numbers = #tpu.dot_dimension_numbers<[1], [0], [0], [1], [0, 0, 1, 1], [], []>} : vector<4x768xf32>, vector<768x768xf32>, vector<4x768xf32> -> vector<4x768xf32>
    %c0_3 = arith.constant 0 : index
    %c0_4 = arith.constant 0 : index
    %3 = vector.load %arg3[%c0_3, %c0_4] : memref<1x768xf32, #tpu.memory_space<vmem>>, vector<1x768xf32>
    %4 = vector.broadcast %3 : vector<1x768xf32> to vector<4x768xf32>
    %5 = arith.addf %2, %4 : vector<4x768xf32>
    %6 = math.tanh %5 : vector<4x768xf32>
    %c0_5 = arith.constant 0 : index
    %c0_6 = arith.constant 0 : index
    %7 = vector.load %arg1[%c0_5, %c0_6] : memref<4x40xf32, #tpu.memory_space<vmem>>, vector<4x40xf32>
    %c0_7 = arith.constant 0 : index
    %c0_8 = arith.constant 0 : index
    %8 = vector.load %arg4[%c0_7, %c0_8] : memref<40x768xf32, #tpu.memory_space<vmem>>, vector<40x768xf32>
    %cst_9 = arith.constant dense<0.000000e+00> : vector<4x768xf32>
    %9 = tpu.matmul %7, %8, %cst_9 {dimension_numbers = #tpu.dot_dimension_numbers<[1], [0], [0], [1], [0, 0, 1, 1], [], []>} : vector<4x40xf32>, vector<40x768xf32>, vector<4x768xf32> -> vector<4x768xf32>
    %c0_10 = arith.constant 0 : index
    %c0_11 = arith.constant 0 : index
    %10 = vector.load %arg5[%c0_10, %c0_11] : memref<1x768xf32, #tpu.memory_space<vmem>>, vector<1x768xf32>
    %11 = vector.broadcast %10 : vector<1x768xf32> to vector<4x768xf32>
    %12 = arith.addf %9, %11 : vector<4x768xf32>
    %13 = vector.shape_cast %6 : vector<4x768xf32> to vector<1x4x768xf32>
    %cst_12 = arith.constant dense<0.000000e+00> : vector<1xf32>
    %14 = vector.multi_reduction <add>, %13, %cst_12 [1, 2] : vector<1x4x768xf32> to vector<1xf32>
    %15 = vector.shape_cast %14 : vector<1xf32> to vector<1x1x1xf32>
    %16 = vector.extract %15[0, 0, 0] : f32 from vector<1x1x1xf32>
    %17 = vector.shape_cast %12 : vector<4x768xf32> to vector<1x4x768xf32>
    %cst_13 = arith.constant dense<0.000000e+00> : vector<1xf32>
    %18 = vector.multi_reduction <add>, %17, %cst_13 [1, 2] : vector<1x4x768xf32> to vector<1xf32>
    %19 = vector.shape_cast %18 : vector<1xf32> to vector<1x1x1xf32>
    %20 = vector.extract %19[0, 0, 0] : f32 from vector<1x1x1xf32>
    %21 = arith.addf %16, %20 : f32
    %22 = arith.mulf %6, %6 : vector<4x768xf32>
    %23 = vector.shape_cast %22 : vector<4x768xf32> to vector<1x4x768xf32>
    %cst_14 = arith.constant dense<0.000000e+00> : vector<1xf32>
    %24 = vector.multi_reduction <add>, %23, %cst_14 [1, 2] : vector<1x4x768xf32> to vector<1xf32>
    %25 = vector.shape_cast %24 : vector<1xf32> to vector<1x1x1xf32>
    %26 = vector.extract %25[0, 0, 0] : f32 from vector<1x1x1xf32>
    %27 = arith.mulf %12, %12 : vector<4x768xf32>
    %28 = vector.shape_cast %27 : vector<4x768xf32> to vector<1x4x768xf32>
    %cst_15 = arith.constant dense<0.000000e+00> : vector<1xf32>
    %29 = vector.multi_reduction <add>, %28, %cst_15 [1, 2] : vector<1x4x768xf32> to vector<1xf32>
    %30 = vector.shape_cast %29 : vector<1xf32> to vector<1x1x1xf32>
    %31 = vector.extract %30[0, 0, 0] : f32 from vector<1x1x1xf32>
    %32 = arith.addf %26, %31 : f32
    %cst_16 = arith.constant 6.144000e+03 : f32
    %33 = arith.divf %21, %cst_16 : f32
    %cst_17 = arith.constant 6.144000e+03 : f32
    %34 = arith.divf %32, %cst_17 : f32
    %35 = arith.mulf %33, %33 : f32
    %36 = arith.subf %34, %35 : f32
    %cst_18 = arith.constant 9.99999974E-6 : f32
    %37 = arith.addf %36, %cst_18 : f32
    %38 = math.rsqrt %37 : f32
    %39 = vector.broadcast %33 : f32 to vector<4x768xf32>
    %40 = arith.subf %6, %39 : vector<4x768xf32>
    %41 = vector.broadcast %38 : f32 to vector<4x768xf32>
    %42 = arith.mulf %40, %41 : vector<4x768xf32>
    %c0_19 = arith.constant 0 : index
    %c0_20 = arith.constant 0 : index
    %43 = vector.load %arg6[%c0_19, %c0_20] : memref<4x768xf32, #tpu.memory_space<vmem>>, vector<4x768xf32>
    %44 = arith.mulf %42, %43 : vector<4x768xf32>
    %c0_21 = arith.constant 0 : index
    %c0_22 = arith.constant 0 : index
    %45 = vector.load %arg7[%c0_21, %c0_22] : memref<4x768xf32, #tpu.memory_space<vmem>>, vector<4x768xf32>
    %46 = arith.addf %44, %45 : vector<4x768xf32>
    %47 = vector.broadcast %33 : f32 to vector<4x768xf32>
    %48 = arith.subf %12, %47 : vector<4x768xf32>
    %49 = vector.broadcast %38 : f32 to vector<4x768xf32>
    %50 = arith.mulf %48, %49 : vector<4x768xf32>
    %c0_23 = arith.constant 0 : index
    %c0_24 = arith.constant 0 : index
    %51 = vector.load %arg8[%c0_23, %c0_24] : memref<4x768xf32, #tpu.memory_space<vmem>>, vector<4x768xf32>
    %52 = arith.mulf %50, %51 : vector<4x768xf32>
    %c0_25 = arith.constant 0 : index
    %c0_26 = arith.constant 0 : index
    %53 = vector.load %arg9[%c0_25, %c0_26] : memref<4x768xf32, #tpu.memory_space<vmem>>, vector<4x768xf32>
    %54 = arith.addf %52, %53 : vector<4x768xf32>
    %c0_27 = arith.constant 0 : index
    %c0_28 = arith.constant 0 : index
    %55 = vector.load %arg10[%c0_27, %c0_28] : memref<768x32xf32, #tpu.memory_space<vmem>>, vector<768x32xf32>
    %cst_29 = arith.constant dense<0.000000e+00> : vector<4x32xf32>
    %56 = tpu.matmul %46, %55, %cst_29 {dimension_numbers = #tpu.dot_dimension_numbers<[1], [0], [0], [1], [0, 0, 1, 1], [], []>} : vector<4x768xf32>, vector<768x32xf32>, vector<4x32xf32> -> vector<4x32xf32>
    %c0_30 = arith.constant 0 : index
    %c0_31 = arith.constant 0 : index
    %57 = vector.load %arg11[%c0_30, %c0_31] : memref<768x32xf32, #tpu.memory_space<vmem>>, vector<768x32xf32>
    %cst_32 = arith.constant dense<0.000000e+00> : vector<4x32xf32>
    %58 = tpu.matmul %54, %57, %cst_32 {dimension_numbers = #tpu.dot_dimension_numbers<[1], [0], [0], [1], [0, 0, 1, 1], [], []>} : vector<4x768xf32>, vector<768x32xf32>, vector<4x32xf32> -> vector<4x32xf32>
    %59 = arith.addf %56, %58 : vector<4x32xf32>
    %c0_33 = arith.constant 0 : index
    %c0_34 = arith.constant 0 : index
    %60 = vector.load %arg12[%c0_33, %c0_34] : memref<1x32xf32, #tpu.memory_space<vmem>>, vector<1x32xf32>
    %61 = vector.broadcast %60 : vector<1x32xf32> to vector<4x32xf32>
    %62 = arith.addf %59, %61 : vector<4x32xf32>
    %cst_35 = arith.constant 0.000000e+00 : f32
    %63 = vector.broadcast %cst_35 : f32 to vector<4x32xf32>
    %64 = arith.maximumf %62, %63 : vector<4x32xf32>
    %65 = vector.shape_cast %64 : vector<4x32xf32> to vector<1x4x32xf32>
    %cst_36 = arith.constant dense<0.000000e+00> : vector<1xf32>
    %66 = vector.multi_reduction <add>, %65, %cst_36 [1, 2] : vector<1x4x32xf32> to vector<1xf32>
    %67 = vector.shape_cast %66 : vector<1xf32> to vector<1x1x1xf32>
    %68 = vector.extract %67[0, 0, 0] : f32 from vector<1x1x1xf32>
    %cst_37 = arith.constant 1.280000e+02 : f32
    %69 = arith.divf %68, %cst_37 : f32
    %70 = arith.mulf %64, %64 : vector<4x32xf32>
    %71 = vector.shape_cast %70 : vector<4x32xf32> to vector<1x4x32xf32>
    %cst_38 = arith.constant dense<0.000000e+00> : vector<1xf32>
    %72 = vector.multi_reduction <add>, %71, %cst_38 [1, 2] : vector<1x4x32xf32> to vector<1xf32>
    %73 = vector.shape_cast %72 : vector<1xf32> to vector<1x1x1xf32>
    %74 = vector.extract %73[0, 0, 0] : f32 from vector<1x1x1xf32>
    %cst_39 = arith.constant 1.280000e+02 : f32
    %75 = arith.divf %74, %cst_39 : f32
    %76 = arith.mulf %69, %69 : f32
    %77 = arith.subf %75, %76 : f32
    %78 = vector.broadcast %69 : f32 to vector<4x32xf32>
    %79 = arith.subf %64, %78 : vector<4x32xf32>
    %cst_40 = arith.constant 9.99999974E-6 : f32
    %80 = arith.addf %77, %cst_40 : f32
    %81 = math.rsqrt %80 : f32
    %82 = vector.broadcast %81 : f32 to vector<4x32xf32>
    %83 = arith.mulf %79, %82 : vector<4x32xf32>
    %c0_41 = arith.constant 0 : index
    %c0_42 = arith.constant 0 : index
    %84 = vector.load %arg13[%c0_41, %c0_42] : memref<4x32xf32, #tpu.memory_space<vmem>>, vector<4x32xf32>
    %85 = arith.mulf %83, %84 : vector<4x32xf32>
    %c0_43 = arith.constant 0 : index
    %c0_44 = arith.constant 0 : index
    %86 = vector.load %arg14[%c0_43, %c0_44] : memref<4x32xf32, #tpu.memory_space<vmem>>, vector<4x32xf32>
    %87 = arith.addf %85, %86 : vector<4x32xf32>
    %c0_45 = arith.constant 0 : index
    %c0_46 = arith.constant 0 : index
    %88 = vector.load %arg15[%c0_45, %c0_46] : memref<1x32xf32, #tpu.memory_space<vmem>>, vector<1x32xf32>
    %89 = vector.broadcast %88 : vector<1x32xf32> to vector<4x32xf32>
    %90 = arith.mulf %87, %89 : vector<4x32xf32>
    %cst_47 = arith.constant dense<0.000000e+00> : vector<4xf32>
    %91 = vector.multi_reduction <add>, %90, %cst_47 [1] : vector<4x32xf32> to vector<4xf32>
    %92 = vector.shape_cast %91 : vector<4xf32> to vector<4x1xf32>
    %c0_48 = arith.constant 0 : index
    %c0_49 = arith.constant 0 : index
    %93 = vector.load %arg16[%c0_48, %c0_49] : memref<1x1xf32, #tpu.memory_space<vmem>>, vector<1x1xf32>
    %94 = vector.broadcast %93 : vector<1x1xf32> to vector<4x1xf32>
    %95 = arith.addf %92, %94 : vector<4x1xf32>
    %96 = math.tanh %95 : vector<4x1xf32>
    %cst_50 = arith.constant 2.500000e+00 : f32
    %97 = vector.broadcast %cst_50 : f32 to vector<4x1xf32>
    %98 = arith.mulf %96, %97 : vector<4x1xf32>
    %99 = vector.shape_cast %98 : vector<4x1xf32> to vector<4x1xf32>
    %100 = vector.broadcast %99 : vector<4x1xf32> to vector<4x128xf32>
    %c0_51 = arith.constant 0 : index
    %c0_52 = arith.constant 0 : index
    %101 = vector.load %arg17[%c0_51, %c0_52] : memref<4x128xf32, #tpu.memory_space<vmem>>, vector<4x128xf32>
    tpu.vector_store %arg17[%c0_51, %c0_52], %100 {strides = array<i32>} : memref<4x128xf32, #tpu.memory_space<vmem>>, vector<4x128xf32>,
    return
  }
}

</mosaic_0001>

<llo_original>
// kernel: custom_multi_model_simple_pooled.1
$region0: #{custom_multi_model_simple_pooled.1}
  #allocation0 [shape = 'u32[]', space=smem, size = 0x4, offset = 0x4, fixed_abs, tag = 'smem constant byte address 0x4 - core index']
  #allocation1 [shape = 'u32[72,128]{1,0:T(1,128)}', space=vmem, size = 0x9000, scoped, tag = 'internal scratch']
  #allocation2 [shape = 'f32[1,1]{1,0:T(1,128)S(1)}', space=vmem, size = 0x200, scoped, tag = 'scoped memory for custom_multi_model_simple_pooled.1']
  %s0 = inlined_call_operand.vmem [shape: f32[4,768], index: 0, kind: input, shape index: {}]
  %s1 = inlined_call_operand.vmem [shape: f32[4,40], index: 1, kind: input, shape index: {}]
  %s2 = inlined_call_operand.vmem [shape: f32[768,768], index: 2, kind: input, shape index: {}]
  %s3 = inlined_call_operand.vmem [shape: f32[1,768], index: 3, kind: input, shape index: {}]
  %s4 = inlined_call_operand.vmem [shape: f32[40,768], index: 4, kind: input, shape index: {}]
  %s5 = inlined_call_operand.vmem [shape: f32[1,768], index: 5, kind: input, shape index: {}]
  %s6 = inlined_call_operand.vmem [shape: f32[4,768], index: 6, kind: input, shape index: {}]
  %s7 = inlined_call_operand.vmem [shape: f32[4,768], index: 7, kind: input, shape index: {}]
  %s8 = inlined_call_operand.vmem [shape: f32[4,768], index: 8, kind: input, shape index: {}]
  %s9 = inlined_call_operand.vmem [shape: f32[4,768], index: 9, kind: input, shape index: {}]
  %s10 = inlined_call_operand.vmem [shape: f32[768,32], index: 10, kind: input, shape index: {}]
  %s11 = inlined_call_operand.vmem [shape: f32[768,32], index: 11, kind: input, shape index: {}]
  %s12 = inlined_call_operand.vmem [shape: f32[1,32], index: 12, kind: input, shape index: {}]
  %s13 = inlined_call_operand.vmem [shape: f32[4,32], index: 13, kind: input, shape index: {}]
  %s14 = inlined_call_operand.vmem [shape: f32[4,32], index: 14, kind: input, shape index: {}]
  %s15 = inlined_call_operand.vmem [shape: f32[1,32], index: 15, kind: input, shape index: {}]
  %s16 = inlined_call_operand.<no memory space> [shape: f32[1,1], index: 16, kind: input, shape index: {}]
  %s17 = inlined_call_operand.vmem [shape: f32[4,128], index: 17, kind: output, shape index: {}]
  %s18 = sld [smem:[#allocation0]]
  $region78: #{custom_multi_model_simple_pooled.1} parent=0
    _
  %s20 = ssub.s32 1, %s18
  %s21 = scalar_select 0, %s20, %s18
  %v22 = vstv %s16
  %23 = vst [vmem:[#allocation2] sm:$0x1] %v22
  // Predicated region
  $region2: #{custom_multi_model_simple_pooled.1} parent=0 // pred_check
    _
  $region3: #{custom_multi_model_simple_pooled.1} parent=0 // pred_check_branch
    %25 = sbr.rel (0) target = $region5
  $region4: #{custom_multi_model_simple_pooled.1} parent=0 // pred_region
    _
  $region5: #{custom_multi_model_simple_pooled.1} parent=0 // pred_fallthru
    _
  // Predicated region
  $region6: #{custom_multi_model_simple_pooled.1} parent=0 // pred_check
    _
  $region7: #{custom_multi_model_simple_pooled.1} parent=0 // pred_check_branch
    %27 = sbr.rel (0) target = $region9
  $region8: #{custom_multi_model_simple_pooled.1} parent=0 // pred_region
    _
  $region9: #{custom_multi_model_simple_pooled.1} parent=0 // pred_fallthru
    _
  // Predicated region
  $region10: #{custom_multi_model_simple_pooled.1} parent=0 // pred_check
    _
  $region11: #{custom_multi_model_simple_pooled.1} parent=0 // pred_check_branch
    %29 = sbr.rel (0) target = $region13
  $region12: #{custom_multi_model_simple_pooled.1} parent=0 // pred_region
    _
  $region13: #{custom_multi_model_simple_pooled.1} parent=0 // pred_fallthru
    _
  // Predicated region
  $region14: #{custom_multi_model_simple_pooled.1} parent=0 // pred_check
    _
  $region15: #{custom_multi_model_simple_pooled.1} parent=0 // pred_check_branch
    %31 = sbr.rel (0) target = $region17
  $region16: #{custom_multi_model_simple_pooled.1} parent=0 // pred_region
    _
  $region17: #{custom_multi_model_simple_pooled.1} parent=0 // pred_fallthru
    _
  // Predicated region
  $region18: #{custom_multi_model_simple_pooled.1} parent=0 // pred_check
    _
  $region19: #{custom_multi_model_simple_pooled.1} parent=0 // pred_check_branch
    %33 = sbr.rel (0) target = $region21
  $region20: #{custom_multi_model_simple_pooled.1} parent=0 // pred_region
    _
  $region21: #{custom_multi_model_simple_pooled.1} parent=0 // pred_fallthru
    _
  // Predicated region
  $region22: #{custom_multi_model_simple_pooled.1} parent=0 // pred_check
    _
  $region23: #{custom_multi_model_simple_pooled.1} parent=0 // pred_check_branch
    %35 = sbr.rel (0) target = $region25
  $region24: #{custom_multi_model_simple_pooled.1} parent=0 // pred_region
    _
  $region25: #{custom_multi_model_simple_pooled.1} parent=0 // pred_fallthru
    _
  // Predicated region
  $region26: #{custom_multi_model_simple_pooled.1} parent=0 // pred_check
    _
  $region27: #{custom_multi_model_simple_pooled.1} parent=0 // pred_check_branch
    %37 = sbr.rel (0) target = $region29
  $region28: #{custom_multi_model_simple_pooled.1} parent=0 // pred_region
    _
  $region29: #{custom_multi_model_simple_pooled.1} parent=0 // pred_fallthru
    _
  // Predicated region
  $region30: #{custom_multi_model_simple_pooled.1} parent=0 // pred_check
    _
  $region31: #{custom_multi_model_simple_pooled.1} parent=0 // pred_check_branch
    %39 = sbr.rel (0) target = $region33
  $region32: #{custom_multi_model_simple_pooled.1} parent=0 // pred_region
    _
  $region33: #{custom_multi_model_simple_pooled.1} parent=0 // pred_fallthru
    _
  // Predicated region
  $region34: #{custom_multi_model_simple_pooled.1} parent=0 // pred_check
    _
  $region35: #{custom_multi_model_simple_pooled.1} parent=0 // pred_check_branch
    %41 = sbr.rel (0) target = $region37
  $region36: #{custom_multi_model_simple_pooled.1} parent=0 // pred_region
    _
  $region37: #{custom_multi_model_simple_pooled.1} parent=0 // pred_fallthru
    _
  // Predicated region
  $region38: #{custom_multi_model_simple_pooled.1} parent=0 // pred_check
    _
  $region39: #{custom_multi_model_simple_pooled.1} parent=0 // pred_check_branch
    %43 = sbr.rel (0) target = $region41
  $region40: #{custom_multi_model_simple_pooled.1} parent=0 // pred_region
    _
  $region41: #{custom_multi_model_simple_pooled.1} parent=0 // pred_fallthru
    _
  // Predicated region
  $region42: #{custom_multi_model_simple_pooled.1} parent=0 // pred_check
    _
  $region43: #{custom_multi_model_simple_pooled.1} parent=0 // pred_check_branch
    %45 = sbr.rel (0) target = $region45
  $region44: #{custom_multi_model_simple_pooled.1} parent=0 // pred_region
    _
  $region45: #{custom_multi_model_simple_pooled.1} parent=0 // pred_fallthru
    _
  // Predicated region
  $region46: #{custom_multi_model_simple_pooled.1} parent=0 // pred_check
    _
  $region47: #{custom_multi_model_simple_pooled.1} parent=0 // pred_check_branch
    %47 = sbr.rel (0) target = $region49
  $region48: #{custom_multi_model_simple_pooled.1} parent=0 // pred_region
    _
  $region49: #{custom_multi_model_simple_pooled.1} parent=0 // pred_fallthru
    _
  // Predicated region
  $region50: #{custom_multi_model_simple_pooled.1} parent=0 // pred_check
    _
  $region51: #{custom_multi_model_simple_pooled.1} parent=0 // pred_check_branch
    %49 = sbr.rel (0) target = $region53
  $region52: #{custom_multi_model_simple_pooled.1} parent=0 // pred_region
    _
  $region53: #{custom_multi_model_simple_pooled.1} parent=0 // pred_fallthru
    _
  // Predicated region
  $region54: #{custom_multi_model_simple_pooled.1} parent=0 // pred_check
    _
  $region55: #{custom_multi_model_simple_pooled.1} parent=0 // pred_check_branch
    %51 = sbr.rel (0) target = $region57
  $region56: #{custom_multi_model_simple_pooled.1} parent=0 // pred_region
    _
  $region57: #{custom_multi_model_simple_pooled.1} parent=0 // pred_fallthru
    _
  // Predicated region
  $region58: #{custom_multi_model_simple_pooled.1} parent=0 // pred_check
    _
  $region59: #{custom_multi_model_simple_pooled.1} parent=0 // pred_check_branch
    %53 = sbr.rel (0) target = $region61
  $region60: #{custom_multi_model_simple_pooled.1} parent=0 // pred_region
    _
  $region61: #{custom_multi_model_simple_pooled.1} parent=0 // pred_fallthru
    _
  // Predicated region
  $region62: #{custom_multi_model_simple_pooled.1} parent=0 // pred_check
    _
  $region63: #{custom_multi_model_simple_pooled.1} parent=0 // pred_check_branch
    %55 = sbr.rel (0) target = $region65
  $region64: #{custom_multi_model_simple_pooled.1} parent=0 // pred_region
    _
  $region65: #{custom_multi_model_simple_pooled.1} parent=0 // pred_fallthru
    _
  // Predicated region
  $region66: #{custom_multi_model_simple_pooled.1} parent=0 // pred_check
    _
  $region67: #{custom_multi_model_simple_pooled.1} parent=0 // pred_check_branch
    %57 = sbr.rel (0) target = $region69
  $region68: #{custom_multi_model_simple_pooled.1} parent=0 // pred_region
    _
  $region69: #{custom_multi_model_simple_pooled.1} parent=0 // pred_fallthru
    _
  %v58 = vld [vmem:[%s0] sm:$0xff]
  %v59 = vld [vmem:[%s0 + $0x8] sm:$0xff]
  %v60 = vld [vmem:[%s0 + $0x10] sm:$0xff]
  %v61 = vld [vmem:[%s2] sm:$0xff]
  %v62 = vld [vmem:[%s2 + $0x8] sm:$0xff]
  %v63 = vld [vmem:[%s2 + $0x10] sm:$0xff]
  %v64 = vld [vmem:[%s2 + $0x18] sm:$0xff]
  %v65 = vld [vmem:[%s2 + $0x20] sm:$0xff]
  %v66 = vld [vmem:[%s2 + $0x28] sm:$0xff]
  %v67 = vld [vmem:[%s2 + $0x30] sm:$0xff]
  %v68 = vld [vmem:[%s2 + $0x38] sm:$0xff]
  %v69 = vld [vmem:[%s2 + $0x40] sm:$0xff]
  %v70 = vld [vmem:[%s2 + $0x48] sm:$0xff]
  %v71 = vld [vmem:[%s2 + $0x50] sm:$0xff]
  %v72 = vld [vmem:[%s2 + $0x58] sm:$0xff]
  %v73 = vld [vmem:[%s2 + $0x60] sm:$0xff]
  %v74 = vld [vmem:[%s2 + $0x68] sm:$0xff]
  %v75 = vld [vmem:[%s2 + $0x70] sm:$0xff]
  %v76 = vld [vmem:[%s2 + $0x78] sm:$0xff]
  %v77 = vld [vmem:[%s2 + $0x80] sm:$0xff]
  %v78 = vld [vmem:[%s2 + $0x88] sm:$0xff]
  %v79 = vld [vmem:[%s2 + $0x90] sm:$0xff]
  %v80 = vld [vmem:[%s2 + $0x98] sm:$0xff]
  %v81 = vld [vmem:[%s2 + $0xa0] sm:$0xff]
  %v82 = vld [vmem:[%s2 + $0xa8] sm:$0xff]
  %v83 = vld [vmem:[%s2 + $0xb0] sm:$0xff]
  %v84 = vld [vmem:[%s2 + $0xb8] sm:$0xff]
  %v85 = vld [vmem:[%s2 + $0xc0] sm:$0xff]
  %v86 = vld [vmem:[%s2 + $0xc8] sm:$0xff]
  %v87 = vld [vmem:[%s2 + $0xd0] sm:$0xff]
  %v88 = vld [vmem:[%s2 + $0xd8] sm:$0xff]
  %v89 = vld [vmem:[%s2 + $0xe0] sm:$0xff]
  %v90 = vld [vmem:[%s2 + $0xe8] sm:$0xff]
  %v91 = vld [vmem:[%s2 + $0xf0] sm:$0xff]
  %v92 = vld [vmem:[%s2 + $0xf8] sm:$0xff]
  %v93 = vld [vmem:[%s2 + $0x100] sm:$0xff]
  %v94 = vld [vmem:[%s2 + $0x108] sm:$0xff]
  %v95 = vld [vmem:[%s2 + $0x110] sm:$0xff]
  %v96 = vld [vmem:[%s2 + $0x118] sm:$0xff]
  %v97 = vld [vmem:[%s2 + $0x120] sm:$0xff]
  %v98 = vld [vmem:[%s2 + $0x128] sm:$0xff]
  %v99 = vld [vmem:[%s2 + $0x130] sm:$0xff]
  %v100 = vld [vmem:[%s2 + $0x138] sm:$0xff]
  %v101 = vld [vmem:[%s2 + $0x140] sm:$0xff]
  %v102 = vld [vmem:[%s2 + $0x148] sm:$0xff]
  %v103 = vld [vmem:[%s2 + $0x150] sm:$0xff]
  %v104 = vld [vmem:[%s2 + $0x158] sm:$0xff]
  %v105 = vld [vmem:[%s2 + $0x160] sm:$0xff]
  %v106 = vld [vmem:[%s2 + $0x168] sm:$0xff]
  %v107 = vld [vmem:[%s2 + $0x170] sm:$0xff]
  %v108 = vld [vmem:[%s2 + $0x178] sm:$0xff]
  %v109 = vld [vmem:[%s2 + $0x180] sm:$0xff]
  %v110 = vld [vmem:[%s2 + $0x188] sm:$0xff]
  %v111 = vld [vmem:[%s2 + $0x190] sm:$0xff]
  %v112 = vld [vmem:[%s2 + $0x198] sm:$0xff]
  %v113 = vld [vmem:[%s2 + $0x1a0] sm:$0xff]
  %v114 = vld [vmem:[%s2 + $0x1a8] sm:$0xff]
  %v115 = vld [vmem:[%s2 + $0x1b0] sm:$0xff]
  %v116 = vld [vmem:[%s2 + $0x1b8] sm:$0xff]
  %v117 = vld [vmem:[%s2 + $0x1c0] sm:$0xff]
  %v118 = vld [vmem:[%s2 + $0x1c8] sm:$0xff]
  %v119 = vld [vmem:[%s2 + $0x1d0] sm:$0xff]
  %v120 = vld [vmem:[%s2 + $0x1d8] sm:$0xff]
  %v121 = vld [vmem:[%s2 + $0x1e0] sm:$0xff]
  %v122 = vld [vmem:[%s2 + $0x1e8] sm:$0xff]
  %v123 = vld [vmem:[%s2 + $0x1f0] sm:$0xff]
  %v124 = vld [vmem:[%s2 + $0x1f8] sm:$0xff]
  %v125 = vld [vmem:[%s2 + $0x200] sm:$0xff]
  %v126 = vld [vmem:[%s2 + $0x208] sm:$0xff]
  %v127 = vld [vmem:[%s2 + $0x210] sm:$0xff]
  %v128 = vld [vmem:[%s2 + $0x218] sm:$0xff]
  %v129 = vld [vmem:[%s2 + $0x220] sm:$0xff]
  %v130 = vld [vmem:[%s2 + $0x228] sm:$0xff]
  %v131 = vld [vmem:[%s2 + $0x230] sm:$0xff]
  %v132 = vld [vmem:[%s2 + $0x238] sm:$0xff]
  %v133 = vld [vmem:[%s2 + $0x240] sm:$0xff]
  %v134 = vld [vmem:[%s2 + $0x248] sm:$0xff]
  %v135 = vld [vmem:[%s2 + $0x250] sm:$0xff]
  %v136 = vld [vmem:[%s2 + $0x258] sm:$0xff]
  %v137 = vld [vmem:[%s2 + $0x260] sm:$0xff]
  %v138 = vld [vmem:[%s2 + $0x268] sm:$0xff]
  %v139 = vld [vmem:[%s2 + $0x270] sm:$0xff]
  %v140 = vld [vmem:[%s2 + $0x278] sm:$0xff]
  %v141 = vld [vmem:[%s2 + $0x280] sm:$0xff]
  %v142 = vld [vmem:[%s2 + $0x288] sm:$0xff]
  %v143 = vld [vmem:[%s2 + $0x290] sm:$0xff]
  %v144 = vld [vmem:[%s2 + $0x298] sm:$0xff]
  %v145 = vld [vmem:[%s2 + $0x2a0] sm:$0xff]
  %v146 = vld [vmem:[%s2 + $0x2a8] sm:$0xff]
  %v147 = vld [vmem:[%s2 + $0x2b0] sm:$0xff]
  %v148 = vld [vmem:[%s2 + $0x2b8] sm:$0xff]
  %v149 = vld [vmem:[%s2 + $0x2c0] sm:$0xff]
  %v150 = vld [vmem:[%s2 + $0x2c8] sm:$0xff]
  %v151 = vld [vmem:[%s2 + $0x2d0] sm:$0xff]
  %v152 = vld [vmem:[%s2 + $0x2d8] sm:$0xff]
  %v153 = vld [vmem:[%s2 + $0x2e0] sm:$0xff]
  %v154 = vld [vmem:[%s2 + $0x2e8] sm:$0xff]
  %v155 = vld [vmem:[%s2 + $0x2f0] sm:$0xff]
  %v156 = vld [vmem:[%s2 + $0x2f8] sm:$0xff]
  %v157 = vld [vmem:[%s2 + $0x300] sm:$0xff]
  %v158 = vld [vmem:[%s2 + $0x308] sm:$0xff]
  %v159 = vld [vmem:[%s2 + $0x310] sm:$0xff]
  %v160 = vld [vmem:[%s2 + $0x318] sm:$0xff]
  %v161 = vld [vmem:[%s2 + $0x320] sm:$0xff]
  %v162 = vld [vmem:[%s2 + $0x328] sm:$0xff]
  %v163 = vld [vmem:[%s2 + $0x330] sm:$0xff]
  %v164 = vld [vmem:[%s2 + $0x338] sm:$0xff]
  %v165 = vld [vmem:[%s2 + $0x340] sm:$0xff]
  %v166 = vld [vmem:[%s2 + $0x348] sm:$0xff]
  %v167 = vld [vmem:[%s2 + $0x350] sm:$0xff]
  %v168 = vld [vmem:[%s2 + $0x358] sm:$0xff]
  %v169 = vld [vmem:[%s2 + $0x360] sm:$0xff]
  %v170 = vld [vmem:[%s2 + $0x368] sm:$0xff]
  %v171 = vld [vmem:[%s2 + $0x370] sm:$0xff]
  %v172 = vld [vmem:[%s2 + $0x378] sm:$0xff]
  %v173 = vld [vmem:[%s2 + $0x380] sm:$0xff]
  %v174 = vld [vmem:[%s2 + $0x388] sm:$0xff]
  %v175 = vld [vmem:[%s2 + $0x390] sm:$0xff]
  %v176 = vld [vmem:[%s2 + $0x398] sm:$0xff]
  %v177 = vld [vmem:[%s2 + $0x3a0] sm:$0xff]
  %v178 = vld [vmem:[%s2 + $0x3a8] sm:$0xff]
  %v179 = vld [vmem:[%s2 + $0x3b0] sm:$0xff]
  %v180 = vld [vmem:[%s2 + $0x3b8] sm:$0xff]
  %v181 = vld [vmem:[%s2 + $0x3c0] sm:$0xff]
  %v182 = vld [vmem:[%s2 + $0x3c8] sm:$0xff]
  %v183 = vld [vmem:[%s2 + $0x3d0] sm:$0xff]
  %v184 = vld [vmem:[%s2 + $0x3d8] sm:$0xff]
  %v185 = vld [vmem:[%s2 + $0x3e0] sm:$0xff]
  %v186 = vld [vmem:[%s2 + $0x3e8] sm:$0xff]
  %v187 = vld [vmem:[%s2 + $0x3f0] sm:$0xff]
  %v188 = vld [vmem:[%s2 + $0x3f8] sm:$0xff]
  %v189 = vld [vmem:[%s2 + $0x400] sm:$0xff]
  %v190 = vld [vmem:[%s2 + $0x408] sm:$0xff]
  %v191 = vld [vmem:[%s2 + $0x410] sm:$0xff]
  %v192 = vld [vmem:[%s2 + $0x418] sm:$0xff]
  %v193 = vld [vmem:[%s2 + $0x420] sm:$0xff]
  %v194 = vld [vmem:[%s2 + $0x428] sm:$0xff]
  %v195 = vld [vmem:[%s2 + $0x430] sm:$0xff]
  %v196 = vld [vmem:[%s2 + $0x438] sm:$0xff]
  %v197 = vld [vmem:[%s2 + $0x440] sm:$0xff]
  %v198 = vld [vmem:[%s2 + $0x448] sm:$0xff]
  %v199 = vld [vmem:[%s2 + $0x450] sm:$0xff]
  %v200 = vld [vmem:[%s2 + $0x458] sm:$0xff]
  %v201 = vld [vmem:[%s2 + $0x460] sm:$0xff]
  %v202 = vld [vmem:[%s2 + $0x468] sm:$0xff]
  %v203 = vld [vmem:[%s2 + $0x470] sm:$0xff]
  %v204 = vld [vmem:[%s2 + $0x478] sm:$0xff]
  %v205 = vld [vmem:[%s2 + $0x480] sm:$0xff]
  %v206 = vld [vmem:[%s2 + $0x488] sm:$0xff]
  %v207 = vld [vmem:[%s2 + $0x490] sm:$0xff]
  %v208 = vld [vmem:[%s2 + $0x498] sm:$0xff]
  %v209 = vld [vmem:[%s2 + $0x4a0] sm:$0xff]
  %v210 = vld [vmem:[%s2 + $0x4a8] sm:$0xff]
  %v211 = vld [vmem:[%s2 + $0x4b0] sm:$0xff]
  %v212 = vld [vmem:[%s2 + $0x4b8] sm:$0xff]
  %v213 = vld [vmem:[%s2 + $0x4c0] sm:$0xff]
  %v214 = vld [vmem:[%s2 + $0x4c8] sm:$0xff]
  %v215 = vld [vmem:[%s2 + $0x4d0] sm:$0xff]
  %v216 = vld [vmem:[%s2 + $0x4d8] sm:$0xff]
  %v217 = vld [vmem:[%s2 + $0x4e0] sm:$0xff]
  %v218 = vld [vmem:[%s2 + $0x4e8] sm:$0xff]
  %v219 = vld [vmem:[%s2 + $0x4f0] sm:$0xff]
  %v220 = vld [vmem:[%s2 + $0x4f8] sm:$0xff]
  %v221 = vld [vmem:[%s2 + $0x500] sm:$0xff]
  %v222 = vld [vmem:[%s2 + $0x508] sm:$0xff]
  %v223 = vld [vmem:[%s2 + $0x510] sm:$0xff]
  %v224 = vld [vmem:[%s2 + $0x518] sm:$0xff]
  %v225 = vld [vmem:[%s2 + $0x520] sm:$0xff]
  %v226 = vld [vmem:[%s2 + $0x528] sm:$0xff]
  %v227 = vld [vmem:[%s2 + $0x530] sm:$0xff]
  %v228 = vld [vmem:[%s2 + $0x538] sm:$0xff]
  %v229 = vld [vmem:[%s2 + $0x540] sm:$0xff]
  %v230 = vld [vmem:[%s2 + $0x548] sm:$0xff]
  %v231 = vld [vmem:[%s2 + $0x550] sm:$0xff]
  %v232 = vld [vmem:[%s2 + $0x558] sm:$0xff]
  %v233 = vld [vmem:[%s2 + $0x560] sm:$0xff]
  %v234 = vld [vmem:[%s2 + $0x568] sm:$0xff]
  %v235 = vld [vmem:[%s2 + $0x570] sm:$0xff]
  %v236 = vld [vmem:[%s2 + $0x578] sm:$0xff]
  %v237 = vld [vmem:[%s2 + $0x580] sm:$0xff]
  %v238 = vld [vmem:[%s2 + $0x588] sm:$0xff]
  %v239 = vld [vmem:[%s2 + $0x590] sm:$0xff]
  %v240 = vld [vmem:[%s2 + $0x598] sm:$0xff]
  %v241 = vld [vmem:[%s2 + $0x5a0] sm:$0xff]
  %v242 = vld [vmem:[%s2 + $0x5a8] sm:$0xff]
  %v243 = vld [vmem:[%s2 + $0x5b0] sm:$0xff]
  %v244 = vld [vmem:[%s2 + $0x5b8] sm:$0xff]
  %v245 = vld [vmem:[%s2 + $0x5c0] sm:$0xff]
  %v246 = vld [vmem:[%s2 + $0x5c8] sm:$0xff]
  %v247 = vld [vmem:[%s2 + $0x5d0] sm:$0xff]
  %v248 = vld [vmem:[%s2 + $0x5d8] sm:$0xff]
  %v249 = vld [vmem:[%s2 + $0x5e0] sm:$0xff]
  %v250 = vld [vmem:[%s2 + $0x5e8] sm:$0xff]
  %v251 = vld [vmem:[%s2 + $0x5f0] sm:$0xff]
  %v252 = vld [vmem:[%s2 + $0x5f8] sm:$0xff]
  %v253 = vld [vmem:[%s2 + $0x600] sm:$0xff]
  %v254 = vld [vmem:[%s2 + $0x608] sm:$0xff]
  %v255 = vld [vmem:[%s2 + $0x610] sm:$0xff]
  %v256 = vld [vmem:[%s2 + $0x618] sm:$0xff]
  %v257 = vld [vmem:[%s2 + $0x620] sm:$0xff]
  %v258 = vld [vmem:[%s2 + $0x628] sm:$0xff]
  %v259 = vld [vmem:[%s2 + $0x630] sm:$0xff]
  %v260 = vld [vmem:[%s2 + $0x638] sm:$0xff]
  %v261 = vld [vmem:[%s2 + $0x640] sm:$0xff]
  %v262 = vld [vmem:[%s2 + $0x648] sm:$0xff]
  %v263 = vld [vmem:[%s2 + $0x650] sm:$0xff]
  %v264 = vld [vmem:[%s2 + $0x658] sm:$0xff]
  %v265 = vld [vmem:[%s2 + $0x660] sm:$0xff]
  %v266 = vld [vmem:[%s2 + $0x668] sm:$0xff]
  %v267 = vld [vmem:[%s2 + $0x670] sm:$0xff]
  %v268 = vld [vmem:[%s2 + $0x678] sm:$0xff]
  %v269 = vld [vmem:[%s2 + $0x680] sm:$0xff]
  %v270 = vld [vmem:[%s2 + $0x688] sm:$0xff]
  %v271 = vld [vmem:[%s2 + $0x690] sm:$0xff]
  %v272 = vld [vmem:[%s2 + $0x698] sm:$0xff]
  %v273 = vld [vmem:[%s2 + $0x6a0] sm:$0xff]
  %v274 = vld [vmem:[%s2 + $0x6a8] sm:$0xff]
  %v275 = vld [vmem:[%s2 + $0x6b0] sm:$0xff]
  %v276 = vld [vmem:[%s2 + $0x6b8] sm:$0xff]
  %v277 = vld [vmem:[%s2 + $0x6c0] sm:$0xff]
  %v278 = vld [vmem:[%s2 + $0x6c8] sm:$0xff]
  %v279 = vld [vmem:[%s2 + $0x6d0] sm:$0xff]
  %v280 = vld [vmem:[%s2 + $0x6d8] sm:$0xff]
  %v281 = vld [vmem:[%s2 + $0x6e0] sm:$0xff]
  %v282 = vld [vmem:[%s2 + $0x6e8] sm:$0xff]
  %v283 = vld [vmem:[%s2 + $0x6f0] sm:$0xff]
  %v284 = vld [vmem:[%s2 + $0x6f8] sm:$0xff]
  %v285 = vld [vmem:[%s2 + $0x700] sm:$0xff]
  %v286 = vld [vmem:[%s2 + $0x708] sm:$0xff]
  %v287 = vld [vmem:[%s2 + $0x710] sm:$0xff]
  %v288 = vld [vmem:[%s2 + $0x718] sm:$0xff]
  %v289 = vld [vmem:[%s2 + $0x720] sm:$0xff]
  %v290 = vld [vmem:[%s2 + $0x728] sm:$0xff]
  %v291 = vld [vmem:[%s2 + $0x730] sm:$0xff]
  %v292 = vld [vmem:[%s2 + $0x738] sm:$0xff]
  %v293 = vld [vmem:[%s2 + $0x740] sm:$0xff]
  %v294 = vld [vmem:[%s2 + $0x748] sm:$0xff]
  %v295 = vld [vmem:[%s2 + $0x750] sm:$0xff]
  %v296 = vld [vmem:[%s2 + $0x758] sm:$0xff]
  %v297 = vld [vmem:[%s2 + $0x760] sm:$0xff]
  %v298 = vld [vmem:[%s2 + $0x768] sm:$0xff]
  %v299 = vld [vmem:[%s2 + $0x770] sm:$0xff]
  %v300 = vld [vmem:[%s2 + $0x778] sm:$0xff]
  %v301 = vld [vmem:[%s2 + $0x780] sm:$0xff]
  %v302 = vld [vmem:[%s2 + $0x788] sm:$0xff]
  %v303 = vld [vmem:[%s2 + $0x790] sm:$0xff]
  %v304 = vld [vmem:[%s2 + $0x798] sm:$0xff]
  %v305 = vld [vmem:[%s2 + $0x7a0] sm:$0xff]
  %v306 = vld [vmem:[%s2 + $0x7a8] sm:$0xff]
  %v307 = vld [vmem:[%s2 + $0x7b0] sm:$0xff]
  %v308 = vld [vmem:[%s2 + $0x7b8] sm:$0xff]
  %v309 = vld [vmem:[%s2 + $0x7c0] sm:$0xff]
  %v310 = vld [vmem:[%s2 + $0x7c8] sm:$0xff]
  %v311 = vld [vmem:[%s2 + $0x7d0] sm:$0xff]
  %v312 = vld [vmem:[%s2 + $0x7d8] sm:$0xff]
  %v313 = vld [vmem:[%s2 + $0x7e0] sm:$0xff]
  %v314 = vld [vmem:[%s2 + $0x7e8] sm:$0xff]
  %v315 = vld [vmem:[%s2 + $0x7f0] sm:$0xff]
  %v316 = vld [vmem:[%s2 + $0x7f8] sm:$0xff]
  %v317 = vld [vmem:[%s2 + $0x800] sm:$0xff]
  %v318 = vld [vmem:[%s2 + $0x808] sm:$0xff]
  %v319 = vld [vmem:[%s2 + $0x810] sm:$0xff]
  %v320 = vld [vmem:[%s2 + $0x818] sm:$0xff]
  %v321 = vld [vmem:[%s2 + $0x820] sm:$0xff]
  %v322 = vld [vmem:[%s2 + $0x828] sm:$0xff]
  %v323 = vld [vmem:[%s2 + $0x830] sm:$0xff]
  %v324 = vld [vmem:[%s2 + $0x838] sm:$0xff]
  %v325 = vld [vmem:[%s2 + $0x840] sm:$0xff]
  %v326 = vld [vmem:[%s2 + $0x848] sm:$0xff]
  %v327 = vld [vmem:[%s2 + $0x850] sm:$0xff]
  %v328 = vld [vmem:[%s2 + $0x858] sm:$0xff]
  %v329 = vld [vmem:[%s2 + $0x860] sm:$0xff]
  %v330 = vld [vmem:[%s2 + $0x868] sm:$0xff]
  %v331 = vld [vmem:[%s2 + $0x870] sm:$0xff]
  %v332 = vld [vmem:[%s2 + $0x878] sm:$0xff]
  %v333 = vld [vmem:[%s2 + $0x880] sm:$0xff]
  %v334 = vld [vmem:[%s2 + $0x888] sm:$0xff]
  %v335 = vld [vmem:[%s2 + $0x890] sm:$0xff]
  %v336 = vld [vmem:[%s2 + $0x898] sm:$0xff]
  %v337 = vld [vmem:[%s2 + $0x8a0] sm:$0xff]
  %v338 = vld [vmem:[%s2 + $0x8a8] sm:$0xff]
  %v339 = vld [vmem:[%s2 + $0x8b0] sm:$0xff]
  %v340 = vld [vmem:[%s2 + $0x8b8] sm:$0xff]
  %v341 = vld [vmem:[%s2 + $0x8c0] sm:$0xff]
  %v342 = vld [vmem:[%s2 + $0x8c8] sm:$0xff]
  %v343 = vld [vmem:[%s2 + $0x8d0] sm:$0xff]
  %v344 = vld [vmem:[%s2 + $0x8d8] sm:$0xff]
  %v345 = vld [vmem:[%s2 + $0x8e0] sm:$0xff]
  %v346 = vld [vmem:[%s2 + $0x8e8] sm:$0xff]
  %v347 = vld [vmem:[%s2 + $0x8f0] sm:$0xff]
  %v348 = vld [vmem:[%s2 + $0x8f8] sm:$0xff]
  %v349 = vld [vmem:[%s2 + $0x900] sm:$0xff]
  %v350 = vld [vmem:[%s2 + $0x908] sm:$0xff]
  %v351 = vld [vmem:[%s2 + $0x910] sm:$0xff]
  %v352 = vld [vmem:[%s2 + $0x918] sm:$0xff]
  %v353 = vld [vmem:[%s2 + $0x920] sm:$0xff]
  %v354 = vld [vmem:[%s2 + $0x928] sm:$0xff]
  %v355 = vld [vmem:[%s2 + $0x930] sm:$0xff]
  %v356 = vld [vmem:[%s2 + $0x938] sm:$0xff]
  %v357 = vld [vmem:[%s2 + $0x940] sm:$0xff]
  %v358 = vld [vmem:[%s2 + $0x948] sm:$0xff]
  %v359 = vld [vmem:[%s2 + $0x950] sm:$0xff]
  %v360 = vld [vmem:[%s2 + $0x958] sm:$0xff]
  %v361 = vld [vmem:[%s2 + $0x960] sm:$0xff]
  %v362 = vld [vmem:[%s2 + $0x968] sm:$0xff]
  %v363 = vld [vmem:[%s2 + $0x970] sm:$0xff]
  %v364 = vld [vmem:[%s2 + $0x978] sm:$0xff]
  %v365 = vld [vmem:[%s2 + $0x980] sm:$0xff]
  %v366 = vld [vmem:[%s2 + $0x988] sm:$0xff]
  %v367 = vld [vmem:[%s2 + $0x990] sm:$0xff]
  %v368 = vld [vmem:[%s2 + $0x998] sm:$0xff]
  %v369 = vld [vmem:[%s2 + $0x9a0] sm:$0xff]
  %v370 = vld [vmem:[%s2 + $0x9a8] sm:$0xff]
  %v371 = vld [vmem:[%s2 + $0x9b0] sm:$0xff]
  %v372 = vld [vmem:[%s2 + $0x9b8] sm:$0xff]
  %v373 = vld [vmem:[%s2 + $0x9c0] sm:$0xff]
  %v374 = vld [vmem:[%s2 + $0x9c8] sm:$0xff]
  %v375 = vld [vmem:[%s2 + $0x9d0] sm:$0xff]
  %v376 = vld [vmem:[%s2 + $0x9d8] sm:$0xff]
  %v377 = vld [vmem:[%s2 + $0x9e0] sm:$0xff]
  %v378 = vld [vmem:[%s2 + $0x9e8] sm:$0xff]
  %v379 = vld [vmem:[%s2 + $0x9f0] sm:$0xff]
  %v380 = vld [vmem:[%s2 + $0x9f8] sm:$0xff]
  %v381 = vld [vmem:[%s2 + $0xa00] sm:$0xff]
  %v382 = vld [vmem:[%s2 + $0xa08] sm:$0xff]
  %v383 = vld [vmem:[%s2 + $0xa10] sm:$0xff]
  %v384 = vld [vmem:[%s2 + $0xa18] sm:$0xff]
  %v385 = vld [vmem:[%s2 + $0xa20] sm:$0xff]
  %v386 = vld [vmem:[%s2 + $0xa28] sm:$0xff]
  %v387 = vld [vmem:[%s2 + $0xa30] sm:$0xff]
  %v388 = vld [vmem:[%s2 + $0xa38] sm:$0xff]
  %v389 = vld [vmem:[%s2 + $0xa40] sm:$0xff]
  %v390 = vld [vmem:[%s2 + $0xa48] sm:$0xff]
  %v391 = vld [vmem:[%s2 + $0xa50] sm:$0xff]
  %v392 = vld [vmem:[%s2 + $0xa58] sm:$0xff]
  %v393 = vld [vmem:[%s2 + $0xa60] sm:$0xff]
  %v394 = vld [vmem:[%s2 + $0xa68] sm:$0xff]
  %v395 = vld [vmem:[%s2 + $0xa70] sm:$0xff]
  %v396 = vld [vmem:[%s2 + $0xa78] sm:$0xff]
  %v397 = vld [vmem:[%s2 + $0xa80] sm:$0xff]
  %v398 = vld [vmem:[%s2 + $0xa88] sm:$0xff]
  %v399 = vld [vmem:[%s2 + $0xa90] sm:$0xff]
  %v400 = vld [vmem:[%s2 + $0xa98] sm:$0xff]
  %v401 = vld [vmem:[%s2 + $0xaa0] sm:$0xff]
  %v402 = vld [vmem:[%s2 + $0xaa8] sm:$0xff]
  %v403 = vld [vmem:[%s2 + $0xab0] sm:$0xff]
  %v404 = vld [vmem:[%s2 + $0xab8] sm:$0xff]
  %v405 = vld [vmem:[%s2 + $0xac0] sm:$0xff]
  %v406 = vld [vmem:[%s2 + $0xac8] sm:$0xff]
  %v407 = vld [vmem:[%s2 + $0xad0] sm:$0xff]
  %v408 = vld [vmem:[%s2 + $0xad8] sm:$0xff]
  %v409 = vld [vmem:[%s2 + $0xae0] sm:$0xff]
  %v410 = vld [vmem:[%s2 + $0xae8] sm:$0xff]
  %v411 = vld [vmem:[%s2 + $0xaf0] sm:$0xff]
  %v412 = vld [vmem:[%s2 + $0xaf8] sm:$0xff]
  %v413 = vld [vmem:[%s2 + $0xb00] sm:$0xff]
  %v414 = vld [vmem:[%s2 + $0xb08] sm:$0xff]
  %v415 = vld [vmem:[%s2 + $0xb10] sm:$0xff]
  %v416 = vld [vmem:[%s2 + $0xb18] sm:$0xff]
  %v417 = vld [vmem:[%s2 + $0xb20] sm:$0xff]
  %v418 = vld [vmem:[%s2 + $0xb28] sm:$0xff]
  %v419 = vld [vmem:[%s2 + $0xb30] sm:$0xff]
  %v420 = vld [vmem:[%s2 + $0xb38] sm:$0xff]
  %v421 = vld [vmem:[%s2 + $0xb40] sm:$0xff]
  %v422 = vld [vmem:[%s2 + $0xb48] sm:$0xff]
  %v423 = vld [vmem:[%s2 + $0xb50] sm:$0xff]
  %v424 = vld [vmem:[%s2 + $0xb58] sm:$0xff]
  %v425 = vld [vmem:[%s2 + $0xb60] sm:$0xff]
  %v426 = vld [vmem:[%s2 + $0xb68] sm:$0xff]
  %v427 = vld [vmem:[%s2 + $0xb70] sm:$0xff]
  %v428 = vld [vmem:[%s2 + $0xb78] sm:$0xff]
  %v429 = vld [vmem:[%s2 + $0xb80] sm:$0xff]
  %v430 = vld [vmem:[%s2 + $0xb88] sm:$0xff]
  %v431 = vld [vmem:[%s2 + $0xb90] sm:$0xff]
  %v432 = vld [vmem:[%s2 + $0xb98] sm:$0xff]
  %v433 = vld [vmem:[%s2 + $0xba0] sm:$0xff]
  %v434 = vld [vmem:[%s2 + $0xba8] sm:$0xff]
  %v435 = vld [vmem:[%s2 + $0xbb0] sm:$0xff]
  %v436 = vld [vmem:[%s2 + $0xbb8] sm:$0xff]
  %v437 = vld [vmem:[%s2 + $0xbc0] sm:$0xff]
  %v438 = vld [vmem:[%s2 + $0xbc8] sm:$0xff]
  %v439 = vld [vmem:[%s2 + $0xbd0] sm:$0xff]
  %v440 = vld [vmem:[%s2 + $0xbd8] sm:$0xff]
  %v441 = vld [vmem:[%s2 + $0xbe0] sm:$0xff]
  %v442 = vld [vmem:[%s2 + $0xbe8] sm:$0xff]
  %v443 = vld [vmem:[%s2 + $0xbf0] sm:$0xff]
  %v444 = vld [vmem:[%s2 + $0xbf8] sm:$0xff]
  %v445 = vld [vmem:[%s2 + $0xc00] sm:$0xff]
  %v446 = vld [vmem:[%s2 + $0xc08] sm:$0xff]
  %v447 = vld [vmem:[%s2 + $0xc10] sm:$0xff]
  %v448 = vld [vmem:[%s2 + $0xc18] sm:$0xff]
  %v449 = vld [vmem:[%s2 + $0xc20] sm:$0xff]
  %v450 = vld [vmem:[%s2 + $0xc28] sm:$0xff]
  %v451 = vld [vmem:[%s2 + $0xc30] sm:$0xff]
  %v452 = vld [vmem:[%s2 + $0xc38] sm:$0xff]
  %v453 = vld [vmem:[%s2 + $0xc40] sm:$0xff]
  %v454 = vld [vmem:[%s2 + $0xc48] sm:$0xff]
  %v455 = vld [vmem:[%s2 + $0xc50] sm:$0xff]
  %v456 = vld [vmem:[%s2 + $0xc58] sm:$0xff]
  %v457 = vld [vmem:[%s2 + $0xc60] sm:$0xff]
  %v458 = vld [vmem:[%s2 + $0xc68] sm:$0xff]
  %v459 = vld [vmem:[%s2 + $0xc70] sm:$0xff]
  %v460 = vld [vmem:[%s2 + $0xc78] sm:$0xff]
  %v461 = vld [vmem:[%s2 + $0xc80] sm:$0xff]
  %v462 = vld [vmem:[%s2 + $0xc88] sm:$0xff]
  %v463 = vld [vmem:[%s2 + $0xc90] sm:$0xff]
  %v464 = vld [vmem:[%s2 + $0xc98] sm:$0xff]
  %v465 = vld [vmem:[%s2 + $0xca0] sm:$0xff]
  %v466 = vld [vmem:[%s2 + $0xca8] sm:$0xff]
  %v467 = vld [vmem:[%s2 + $0xcb0] sm:$0xff]
  %v468 = vld [vmem:[%s2 + $0xcb8] sm:$0xff]
  %v469 = vld [vmem:[%s2 + $0xcc0] sm:$0xff]
  %v470 = vld [vmem:[%s2 + $0xcc8] sm:$0xff]
  %v471 = vld [vmem:[%s2 + $0xcd0] sm:$0xff]
  %v472 = vld [vmem:[%s2 + $0xcd8] sm:$0xff]
  %v473 = vld [vmem:[%s2 + $0xce0] sm:$0xff]
  %v474 = vld [vmem:[%s2 + $0xce8] sm:$0xff]
  %v475 = vld [vmem:[%s2 + $0xcf0] sm:$0xff]
  %v476 = vld [vmem:[%s2 + $0xcf8] sm:$0xff]
  %v477 = vld [vmem:[%s2 + $0xd00] sm:$0xff]
  %v478 = vld [vmem:[%s2 + $0xd08] sm:$0xff]
  %v479 = vld [vmem:[%s2 + $0xd10] sm:$0xff]
  %v480 = vld [vmem:[%s2 + $0xd18] sm:$0xff]
  %v481 = vld [vmem:[%s2 + $0xd20] sm:$0xff]
  %v482 = vld [vmem:[%s2 + $0xd28] sm:$0xff]
  %v483 = vld [vmem:[%s2 + $0xd30] sm:$0xff]
  %v484 = vld [vmem:[%s2 + $0xd38] sm:$0xff]
  %v485 = vld [vmem:[%s2 + $0xd40] sm:$0xff]
  %v486 = vld [vmem:[%s2 + $0xd48] sm:$0xff]
  %v487 = vld [vmem:[%s2 + $0xd50] sm:$0xff]
  %v488 = vld [vmem:[%s2 + $0xd58] sm:$0xff]
  %v489 = vld [vmem:[%s2 + $0xd60] sm:$0xff]
  %v490 = vld [vmem:[%s2 + $0xd68] sm:$0xff]
  %v491 = vld [vmem:[%s2 + $0xd70] sm:$0xff]
  %v492 = vld [vmem:[%s2 + $0xd78] sm:$0xff]
  %v493 = vld [vmem:[%s2 + $0xd80] sm:$0xff]
  %v494 = vld [vmem:[%s2 + $0xd88] sm:$0xff]
  %v495 = vld [vmem:[%s2 + $0xd90] sm:$0xff]
  %v496 = vld [vmem:[%s2 + $0xd98] sm:$0xff]
  %v497 = vld [vmem:[%s2 + $0xda0] sm:$0xff]
  %v498 = vld [vmem:[%s2 + $0xda8] sm:$0xff]
  %v499 = vld [vmem:[%s2 + $0xdb0] sm:$0xff]
  %v500 = vld [vmem:[%s2 + $0xdb8] sm:$0xff]
  %v501 = vld [vmem:[%s2 + $0xdc0] sm:$0xff]
  %v502 = vld [vmem:[%s2 + $0xdc8] sm:$0xff]
  %v503 = vld [vmem:[%s2 + $0xdd0] sm:$0xff]
  %v504 = vld [vmem:[%s2 + $0xdd8] sm:$0xff]
  %v505 = vld [vmem:[%s2 + $0xde0] sm:$0xff]
  %v506 = vld [vmem:[%s2 + $0xde8] sm:$0xff]
  %v507 = vld [vmem:[%s2 + $0xdf0] sm:$0xff]
  %v508 = vld [vmem:[%s2 + $0xdf8] sm:$0xff]
  %v509 = vld [vmem:[%s2 + $0xe00] sm:$0xff]
  %v510 = vld [vmem:[%s2 + $0xe08] sm:$0xff]
  %v511 = vld [vmem:[%s2 + $0xe10] sm:$0xff]
  %v512 = vld [vmem:[%s2 + $0xe18] sm:$0xff]
  %v513 = vld [vmem:[%s2 + $0xe20] sm:$0xff]
  %v514 = vld [vmem:[%s2 + $0xe28] sm:$0xff]
  %v515 = vld [vmem:[%s2 + $0xe30] sm:$0xff]
  %v516 = vld [vmem:[%s2 + $0xe38] sm:$0xff]
  %v517 = vld [vmem:[%s2 + $0xe40] sm:$0xff]
  %v518 = vld [vmem:[%s2 + $0xe48] sm:$0xff]
  %v519 = vld [vmem:[%s2 + $0xe50] sm:$0xff]
  %v520 = vld [vmem:[%s2 + $0xe58] sm:$0xff]
  %v521 = vld [vmem:[%s2 + $0xe60] sm:$0xff]
  %v522 = vld [vmem:[%s2 + $0xe68] sm:$0xff]
  %v523 = vld [vmem:[%s2 + $0xe70] sm:$0xff]
  %v524 = vld [vmem:[%s2 + $0xe78] sm:$0xff]
  %v525 = vld [vmem:[%s2 + $0xe80] sm:$0xff]
  %v526 = vld [vmem:[%s2 + $0xe88] sm:$0xff]
  %v527 = vld [vmem:[%s2 + $0xe90] sm:$0xff]
  %v528 = vld [vmem:[%s2 + $0xe98] sm:$0xff]
  %v529 = vld [vmem:[%s2 + $0xea0] sm:$0xff]
  %v530 = vld [vmem:[%s2 + $0xea8] sm:$0xff]
  %v531 = vld [vmem:[%s2 + $0xeb0] sm:$0xff]
  %v532 = vld [vmem:[%s2 + $0xeb8] sm:$0xff]
  %v533 = vld [vmem:[%s2 + $0xec0] sm:$0xff]
  %v534 = vld [vmem:[%s2 + $0xec8] sm:$0xff]
  %v535 = vld [vmem:[%s2 + $0xed0] sm:$0xff]
  %v536 = vld [vmem:[%s2 + $0xed8] sm:$0xff]
  %v537 = vld [vmem:[%s2 + $0xee0] sm:$0xff]
  %v538 = vld [vmem:[%s2 + $0xee8] sm:$0xff]
  %v539 = vld [vmem:[%s2 + $0xef0] sm:$0xff]
  %v540 = vld [vmem:[%s2 + $0xef8] sm:$0xff]
  %v541 = vld [vmem:[%s2 + $0xf00] sm:$0xff]
  %v542 = vld [vmem:[%s2 + $0xf08] sm:$0xff]
  %v543 = vld [vmem:[%s2 + $0xf10] sm:$0xff]
  %v544 = vld [vmem:[%s2 + $0xf18] sm:$0xff]
  %v545 = vld [vmem:[%s2 + $0xf20] sm:$0xff]
  %v546 = vld [vmem:[%s2 + $0xf28] sm:$0xff]
  %v547 = vld [vmem:[%s2 + $0xf30] sm:$0xff]
  %v548 = vld [vmem:[%s2 + $0xf38] sm:$0xff]
  %v549 = vld [vmem:[%s2 + $0xf40] sm:$0xff]
  %v550 = vld [vmem:[%s2 + $0xf48] sm:$0xff]
  %v551 = vld [vmem:[%s2 + $0xf50] sm:$0xff]
  %v552 = vld [vmem:[%s2 + $0xf58] sm:$0xff]
  %v553 = vld [vmem:[%s2 + $0xf60] sm:$0xff]
  %v554 = vld [vmem:[%s2 + $0xf68] sm:$0xff]
  %v555 = vld [vmem:[%s2 + $0xf70] sm:$0xff]
  %v556 = vld [vmem:[%s2 + $0xf78] sm:$0xff]
  %v557 = vld [vmem:[%s2 + $0xf80] sm:$0xff]
  %v558 = vld [vmem:[%s2 + $0xf88] sm:$0xff]
  %v559 = vld [vmem:[%s2 + $0xf90] sm:$0xff]
  %v560 = vld [vmem:[%s2 + $0xf98] sm:$0xff]
  %v561 = vld [vmem:[%s2 + $0xfa0] sm:$0xff]
  %v562 = vld [vmem:[%s2 + $0xfa8] sm:$0xff]
  %v563 = vld [vmem:[%s2 + $0xfb0] sm:$0xff]
  %v564 = vld [vmem:[%s2 + $0xfb8] sm:$0xff]
  %v565 = vld [vmem:[%s2 + $0xfc0] sm:$0xff]
  %v566 = vld [vmem:[%s2 + $0xfc8] sm:$0xff]
  %v567 = vld [vmem:[%s2 + $0xfd0] sm:$0xff]
  %v568 = vld [vmem:[%s2 + $0xfd8] sm:$0xff]
  %v569 = vld [vmem:[%s2 + $0xfe0] sm:$0xff]
  %v570 = vld [vmem:[%s2 + $0xfe8] sm:$0xff]
  %v571 = vld [vmem:[%s2 + $0xff0] sm:$0xff]
  %v572 = vld [vmem:[%s2 + $0xff8] sm:$0xff]
  %v573 = vld [vmem:[%s2 + $0x1000] sm:$0xff]
  %v574 = vld [vmem:[%s2 + $0x1008] sm:$0xff]
  %v575 = vld [vmem:[%s2 + $0x1010] sm:$0xff]
  %v576 = vld [vmem:[%s2 + $0x1018] sm:$0xff]
  %v577 = vld [vmem:[%s2 + $0x1020] sm:$0xff]
  %v578 = vld [vmem:[%s2 + $0x1028] sm:$0xff]
  %v579 = vld [vmem:[%s2 + $0x1030] sm:$0xff]
  %v580 = vld [vmem:[%s2 + $0x1038] sm:$0xff]
  %v581 = vld [vmem:[%s2 + $0x1040] sm:$0xff]
  %v582 = vld [vmem:[%s2 + $0x1048] sm:$0xff]
  %v583 = vld [vmem:[%s2 + $0x1050] sm:$0xff]
  %v584 = vld [vmem:[%s2 + $0x1058] sm:$0xff]
  %v585 = vld [vmem:[%s2 + $0x1060] sm:$0xff]
  %v586 = vld [vmem:[%s2 + $0x1068] sm:$0xff]
  %v587 = vld [vmem:[%s2 + $0x1070] sm:$0xff]
  %v588 = vld [vmem:[%s2 + $0x1078] sm:$0xff]
  %v589 = vld [vmem:[%s2 + $0x1080] sm:$0xff]
  %v590 = vld [vmem:[%s2 + $0x1088] sm:$0xff]
  %v591 = vld [vmem:[%s2 + $0x1090] sm:$0xff]
  %v592 = vld [vmem:[%s2 + $0x1098] sm:$0xff]
  %v593 = vld [vmem:[%s2 + $0x10a0] sm:$0xff]
  %v594 = vld [vmem:[%s2 + $0x10a8] sm:$0xff]
  %v595 = vld [vmem:[%s2 + $0x10b0] sm:$0xff]
  %v596 = vld [vmem:[%s2 + $0x10b8] sm:$0xff]
  %v597 = vld [vmem:[%s2 + $0x10c0] sm:$0xff]
  %v598 = vld [vmem:[%s2 + $0x10c8] sm:$0xff]
  %v599 = vld [vmem:[%s2 + $0x10d0] sm:$0xff]
  %v600 = vld [vmem:[%s2 + $0x10d8] sm:$0xff]
  %v601 = vld [vmem:[%s2 + $0x10e0] sm:$0xff]
  %v602 = vld [vmem:[%s2 + $0x10e8] sm:$0xff]
  %v603 = vld [vmem:[%s2 + $0x10f0] sm:$0xff]
  %v604 = vld [vmem:[%s2 + $0x10f8] sm:$0xff]
  %v605 = vld [vmem:[%s2 + $0x1100] sm:$0xff]
  %v606 = vld [vmem:[%s2 + $0x1108] sm:$0xff]
  %v607 = vld [vmem:[%s2 + $0x1110] sm:$0xff]
  %v608 = vld [vmem:[%s2 + $0x1118] sm:$0xff]
  %v609 = vld [vmem:[%s2 + $0x1120] sm:$0xff]
  %v610 = vld [vmem:[%s2 + $0x1128] sm:$0xff]
  %v611 = vld [vmem:[%s2 + $0x1130] sm:$0xff]
  %v612 = vld [vmem:[%s2 + $0x1138] sm:$0xff]
  %v613 = vld [vmem:[%s2 + $0x1140] sm:$0xff]
  %v614 = vld [vmem:[%s2 + $0x1148] sm:$0xff]
  %v615 = vld [vmem:[%s2 + $0x1150] sm:$0xff]
  %v616 = vld [vmem:[%s2 + $0x1158] sm:$0xff]
  %v617 = vld [vmem:[%s2 + $0x1160] sm:$0xff]
  %v618 = vld [vmem:[%s2 + $0x1168] sm:$0xff]
  %v619 = vld [vmem:[%s2 + $0x1170] sm:$0xff]
  %v620 = vld [vmem:[%s2 + $0x1178] sm:$0xff]
  %v621 = vld [vmem:[%s2 + $0x1180] sm:$0xff]
  %v622 = vld [vmem:[%s2 + $0x1188] sm:$0xff]
  %v623 = vld [vmem:[%s2 + $0x1190] sm:$0xff]
  %v624 = vld [vmem:[%s2 + $0x1198] sm:$0xff]
  %v625 = vld [vmem:[%s2 + $0x11a0] sm:$0xff]
  %v626 = vld [vmem:[%s2 + $0x11a8] sm:$0xff]
  %v627 = vld [vmem:[%s2 + $0x11b0] sm:$0xff]
  %v628 = vld [vmem:[%s2 + $0x11b8] sm:$0xff]
  %v629 = vld [vmem:[%s2 + $0x11c0] sm:$0xff]
  %v630 = vld [vmem:[%s2 + $0x11c8] sm:$0xff]
  %v631 = vld [vmem:[%s2 + $0x11d0] sm:$0xff]
  %v632 = vld [vmem:[%s2 + $0x11d8] sm:$0xff]
  %v633 = vld [vmem:[%s2 + $0x11e0] sm:$0xff]
  %v634 = vld [vmem:[%s2 + $0x11e8] sm:$0xff]
  %v635 = vld [vmem:[%s2 + $0x11f0] sm:$0xff]
  %v636 = vld [vmem:[%s2 + $0x11f8] sm:$0xff]
  %v637 = vld [vmem:[%s3] sm:$0x3f]
  %v639 = vperm.slane %v637, 0
  %v640 = vperm.slane %v637, 1
  %v641 = vperm.slane %v637, 2
  %v642 = vperm.slane %v637, 3
  %v643 = vperm.slane %v637, 4
  %v644 = vperm.slane %v637, 5
  %654 = vst [vmem:[#allocation1] ss:$2 sm:$0xff] %v58
  %s655 = scalar_lea.vmem [#allocation1], 16
  %656 = vst [vmem:[%s655] ss:$2 sm:$0xff] %v59
  %s657 = scalar_lea.vmem [#allocation1], 32
  %658 = vst [vmem:[%s657] ss:$2 sm:$0xff] %v60
  %v659 = vld.sshfl [vmem:[#allocation1] sm:$0xff pattern:$0x75316420]
  %v660 = vld.sshfl [vmem:[#allocation1 + $0x8] sm:$0xff pattern:$0x75316420]
  %v661 = vld.sshfl [vmem:[#allocation1 + $0x10] sm:$0xff pattern:$0x75316420]
  %v662 = vld.sshfl [vmem:[#allocation1 + $0x18] sm:$0xff pattern:$0x75316420]
  %v663 = vld.sshfl [vmem:[#allocation1 + $0x20] sm:$0xff pattern:$0x75316420]
  %v664 = vld.sshfl [vmem:[#allocation1 + $0x28] sm:$0xff pattern:$0x75316420]
  %671 = vmatpush.msra.mxu0 %v151
  %672 = vmatpush.msra.mxu0 %v145
  %673 = vmatpush.msra.mxu0 %v139
  %674 = vmatpush.msra.mxu0 %v133
  %675 = vmatpush.msra.mxu0 %v127
  %676 = vmatpush.msra.mxu0 %v121
  %677 = vmatpush.msra.mxu0 %v115
  %678 = vmatpush.msra.mxu0 %v109
  %679 = vmatpush.msra.mxu0 %v103
  %680 = vmatpush.msra.mxu0 %v97
  %681 = vmatpush.msra.mxu0 %v91
  %682 = vmatpush.msra.mxu0 %v85
  %683 = vmatpush.msra.mxu0 %v79
  %684 = vmatpush.msra.mxu0 %v73
  %685 = vmatpush.msra.mxu0 %v67
  %686 = vmatpush.msra.mxu0 %v61
  %687 = vmatmul.f32.gmra.mxu0 %v659
  %v688 = vpop.f32.mrf.mxu0
  %v689 = vadd.f32 %v639, %v688
  %690 = vdwg.mxu0
  %691 = vmatpush.msra.mxu0 %v247
  %692 = vmatpush.msra.mxu0 %v241
  %693 = vmatpush.msra.mxu0 %v235
  %694 = vmatpush.msra.mxu0 %v229
  %695 = vmatpush.msra.mxu0 %v223
  %696 = vmatpush.msra.mxu0 %v217
  %697 = vmatpush.msra.mxu0 %v211
  %698 = vmatpush.msra.mxu0 %v205
  %699 = vmatpush.msra.mxu0 %v199
  %700 = vmatpush.msra.mxu0 %v193
  %701 = vmatpush.msra.mxu0 %v187
  %702 = vmatpush.msra.mxu0 %v181
  %703 = vmatpush.msra.mxu0 %v175
  %704 = vmatpush.msra.mxu0 %v169
  %705 = vmatpush.msra.mxu0 %v163
  %706 = vmatpush.msra.mxu0 %v157
  %707 = vmatmul.f32.gmra.mxu0 %v660
  %v708 = vpop.f32.mrf.mxu0
  %v709 = vadd.f32 %v689, %v708
  %710 = vdwg.mxu0
  %711 = vmatpush.msra.mxu0 %v343
  %712 = vmatpush.msra.mxu0 %v337
  %713 = vmatpush.msra.mxu0 %v331
  %714 = vmatpush.msra.mxu0 %v325
  %715 = vmatpush.msra.mxu0 %v319
  %716 = vmatpush.msra.mxu0 %v313
  %717 = vmatpush.msra.mxu0 %v307
  %718 = vmatpush.msra.mxu0 %v301
  %719 = vmatpush.msra.mxu0 %v295
  %720 = vmatpush.msra.mxu0 %v289
  %721 = vmatpush.msra.mxu0 %v283
  %722 = vmatpush.msra.mxu0 %v277
  %723 = vmatpush.msra.mxu0 %v271
  %724 = vmatpush.msra.mxu0 %v265
  %725 = vmatpush.msra.mxu0 %v259
  %726 = vmatpush.msra.mxu0 %v253
  %727 = vmatmul.f32.gmra.mxu0 %v661
  %v728 = vpop.f32.mrf.mxu0
  %v729 = vadd.f32 %v709, %v728
  %730 = vdwg.mxu0
  %731 = vmatpush.msra.mxu0 %v439
  %732 = vmatpush.msra.mxu0 %v433
  %733 = vmatpush.msra.mxu0 %v427
  %734 = vmatpush.msra.mxu0 %v421
  %735 = vmatpush.msra.mxu0 %v415
  %736 = vmatpush.msra.mxu0 %v409
  %737 = vmatpush.msra.mxu0 %v403
  %738 = vmatpush.msra.mxu0 %v397
  %739 = vmatpush.msra.mxu0 %v391
  %740 = vmatpush.msra.mxu0 %v385
  %741 = vmatpush.msra.mxu0 %v379
  %742 = vmatpush.msra.mxu0 %v373
  %743 = vmatpush.msra.mxu0 %v367
  %744 = vmatpush.msra.mxu0 %v361
  %745 = vmatpush.msra.mxu0 %v355
  %746 = vmatpush.msra.mxu0 %v349
  %747 = vmatmul.f32.gmra.mxu0 %v662
  %v748 = vpop.f32.mrf.mxu0
  %v749 = vadd.f32 %v729, %v748
  %750 = vdwg.mxu0
  %751 = vmatpush.msra.mxu0 %v535
  %752 = vmatpush.msra.mxu0 %v529
  %753 = vmatpush.msra.mxu0 %v523
  %754 = vmatpush.msra.mxu0 %v517
  %755 = vmatpush.msra.mxu0 %v511
  %756 = vmatpush.msra.mxu0 %v505
  %757 = vmatpush.msra.mxu0 %v499
  %758 = vmatpush.msra.mxu0 %v493
  %759 = vmatpush.msra.mxu0 %v487
  %760 = vmatpush.msra.mxu0 %v481
  %761 = vmatpush.msra.mxu0 %v475
  %762 = vmatpush.msra.mxu0 %v469
  %763 = vmatpush.msra.mxu0 %v463
  %764 = vmatpush.msra.mxu0 %v457
  %765 = vmatpush.msra.mxu0 %v451
  %766 = vmatpush.msra.mxu0 %v445
  %767 = vmatmul.f32.gmra.mxu0 %v663
  %v768 = vpop.f32.mrf.mxu0
  %v769 = vadd.f32 %v749, %v768
  %770 = vdwg.mxu0
  %771 = vmatpush.msra.mxu0 %v631
  %772 = vmatpush.msra.mxu0 %v625
  %773 = vmatpush.msra.mxu0 %v619
  %774 = vmatpush.msra.mxu0 %v613
  %775 = vmatpush.msra.mxu0 %v607
  %776 = vmatpush.msra.mxu0 %v601
  %777 = vmatpush.msra.mxu0 %v595
  %778 = vmatpush.msra.mxu0 %v589
  %779 = vmatpush.msra.mxu0 %v583
  %780 = vmatpush.msra.mxu0 %v577
  %781 = vmatpush.msra.mxu0 %v571
  %782 = vmatpush.msra.mxu0 %v565
  %783 = vmatpush.msra.mxu0 %v559
  %784 = vmatpush.msra.mxu0 %v553
  %785 = vmatpush.msra.mxu0 %v547
  %786 = vmatpush.msra.mxu0 %v541
  %787 = vmatmul.f32.gmra.mxu0 %v664
  %v788 = vpop.f32.mrf.mxu0
  %v789 = vadd.f32 %v769, %v788
  %790 = vdwg.mxu0
  %791 = vmatpush.msra.mxu0 %v152
  %792 = vmatpush.msra.mxu0 %v146
  %793 = vmatpush.msra.mxu0 %v140
  %794 = vmatpush.msra.mxu0 %v134
  %795 = vmatpush.msra.mxu0 %v128
  %796 = vmatpush.msra.mxu0 %v122
  %797 = vmatpush.msra.mxu0 %v116
  %798 = vmatpush.msra.mxu0 %v110
  %799 = vmatpush.msra.mxu0 %v104
  %800 = vmatpush.msra.mxu0 %v98
  %801 = vmatpush.msra.mxu0 %v92
  %802 = vmatpush.msra.mxu0 %v86
  %803 = vmatpush.msra.mxu0 %v80
  %804 = vmatpush.msra.mxu0 %v74
  %805 = vmatpush.msra.mxu0 %v68
  %806 = vmatpush.msra.mxu0 %v62
  %807 = vmatmul.f32.gmra.mxu0 %v659
  %v808 = vpop.f32.mrf.mxu0
  %v809 = vadd.f32 %v640, %v808
  %810 = vdwg.mxu0
  %811 = vmatpush.msra.mxu0 %v248
  %812 = vmatpush.msra.mxu0 %v242
  %813 = vmatpush.msra.mxu0 %v236
  %814 = vmatpush.msra.mxu0 %v230
  %815 = vmatpush.msra.mxu0 %v224
  %816 = vmatpush.msra.mxu0 %v218
  %817 = vmatpush.msra.mxu0 %v212
  %818 = vmatpush.msra.mxu0 %v206
  %819 = vmatpush.msra.mxu0 %v200
  %820 = vmatpush.msra.mxu0 %v194
  %821 = vmatpush.msra.mxu0 %v188
  %822 = vmatpush.msra.mxu0 %v182
  %823 = vmatpush.msra.mxu0 %v176
  %824 = vmatpush.msra.mxu0 %v170
  %825 = vmatpush.msra.mxu0 %v164
  %826 = vmatpush.msra.mxu0 %v158
  %827 = vmatmul.f32.gmra.mxu0 %v660
  %v828 = vpop.f32.mrf.mxu0
  %v829 = vadd.f32 %v809, %v828
  %830 = vdwg.mxu0
  %831 = vmatpush.msra.mxu0 %v344
  %832 = vmatpush.msra.mxu0 %v338
  %833 = vmatpush.msra.mxu0 %v332
  %834 = vmatpush.msra.mxu0 %v326
  %835 = vmatpush.msra.mxu0 %v320
  %836 = vmatpush.msra.mxu0 %v314
  %837 = vmatpush.msra.mxu0 %v308
  %838 = vmatpush.msra.mxu0 %v302
  %839 = vmatpush.msra.mxu0 %v296
  %840 = vmatpush.msra.mxu0 %v290
  %841 = vmatpush.msra.mxu0 %v284
  %842 = vmatpush.msra.mxu0 %v278
  %843 = vmatpush.msra.mxu0 %v272
  %844 = vmatpush.msra.mxu0 %v266
  %845 = vmatpush.msra.mxu0 %v260
  %846 = vmatpush.msra.mxu0 %v254
  %847 = vmatmul.f32.gmra.mxu0 %v661
  %v848 = vpop.f32.mrf.mxu0
  %v849 = vadd.f32 %v829, %v848
  %850 = vdwg.mxu0
  %851 = vmatpush.msra.mxu0 %v440
  %852 = vmatpush.msra.mxu0 %v434
  %853 = vmatpush.msra.mxu0 %v428
  %854 = vmatpush.msra.mxu0 %v422
  %855 = vmatpush.msra.mxu0 %v416
  %856 = vmatpush.msra.mxu0 %v410
  %857 = vmatpush.msra.mxu0 %v404
  %858 = vmatpush.msra.mxu0 %v398
  %859 = vmatpush.msra.mxu0 %v392
  %860 = vmatpush.msra.mxu0 %v386
  %861 = vmatpush.msra.mxu0 %v380
  %862 = vmatpush.msra.mxu0 %v374
  %863 = vmatpush.msra.mxu0 %v368
  %864 = vmatpush.msra.mxu0 %v362
  %865 = vmatpush.msra.mxu0 %v356
  %866 = vmatpush.msra.mxu0 %v350
  %867 = vmatmul.f32.gmra.mxu0 %v662
  %v868 = vpop.f32.mrf.mxu0
  %v869 = vadd.f32 %v849, %v868
  %870 = vdwg.mxu0
  %871 = vmatpush.msra.mxu0 %v536
  %872 = vmatpush.msra.mxu0 %v530
  %873 = vmatpush.msra.mxu0 %v524
  %874 = vmatpush.msra.mxu0 %v518
  %875 = vmatpush.msra.mxu0 %v512
  %876 = vmatpush.msra.mxu0 %v506
  %877 = vmatpush.msra.mxu0 %v500
  %878 = vmatpush.msra.mxu0 %v494
  %879 = vmatpush.msra.mxu0 %v488
  %880 = vmatpush.msra.mxu0 %v482
  %881 = vmatpush.msra.mxu0 %v476
  %882 = vmatpush.msra.mxu0 %v470
  %883 = vmatpush.msra.mxu0 %v464
  %884 = vmatpush.msra.mxu0 %v458
  %885 = vmatpush.msra.mxu0 %v452
  %886 = vmatpush.msra.mxu0 %v446
  %887 = vmatmul.f32.gmra.mxu0 %v663
  %v888 = vpop.f32.mrf.mxu0
  %v889 = vadd.f32 %v869, %v888
  %890 = vdwg.mxu0
  %891 = vmatpush.msra.mxu0 %v632
  %892 = vmatpush.msra.mxu0 %v626
  %893 = vmatpush.msra.mxu0 %v620
  %894 = vmatpush.msra.mxu0 %v614
  %895 = vmatpush.msra.mxu0 %v608
  %896 = vmatpush.msra.mxu0 %v602
  %897 = vmatpush.msra.mxu0 %v596
  %898 = vmatpush.msra.mxu0 %v590
  %899 = vmatpush.msra.mxu0 %v584
  %900 = vmatpush.msra.mxu0 %v578
  %901 = vmatpush.msra.mxu0 %v572
  %902 = vmatpush.msra.mxu0 %v566
  %903 = vmatpush.msra.mxu0 %v560
  %904 = vmatpush.msra.mxu0 %v554
  %905 = vmatpush.msra.mxu0 %v548
  %906 = vmatpush.msra.mxu0 %v542
  %907 = vmatmul.f32.gmra.mxu0 %v664
  %v908 = vpop.f32.mrf.mxu0
  %v909 = vadd.f32 %v889, %v908
  %910 = vdwg.mxu0
  %911 = vmatpush.msra.mxu0 %v153
  %912 = vmatpush.msra.mxu0 %v147
  %913 = vmatpush.msra.mxu0 %v141
  %914 = vmatpush.msra.mxu0 %v135
  %915 = vmatpush.msra.mxu0 %v129
  %916 = vmatpush.msra.mxu0 %v123
  %917 = vmatpush.msra.mxu0 %v117
  %918 = vmatpush.msra.mxu0 %v111
  %919 = vmatpush.msra.mxu0 %v105
  %920 = vmatpush.msra.mxu0 %v99
  %921 = vmatpush.msra.mxu0 %v93
  %922 = vmatpush.msra.mxu0 %v87
  %923 = vmatpush.msra.mxu0 %v81
  %924 = vmatpush.msra.mxu0 %v75
  %925 = vmatpush.msra.mxu0 %v69
  %926 = vmatpush.msra.mxu0 %v63
  %927 = vmatmul.f32.gmra.mxu0 %v659
  %v928 = vpop.f32.mrf.mxu0
  %v929 = vadd.f32 %v641, %v928
  %930 = vdwg.mxu0
  %931 = vmatpush.msra.mxu0 %v249
  %932 = vmatpush.msra.mxu0 %v243
  %933 = vmatpush.msra.mxu0 %v237
  %934 = vmatpush.msra.mxu0 %v231
  %935 = vmatpush.msra.mxu0 %v225
  %936 = vmatpush.msra.mxu0 %v219
  %937 = vmatpush.msra.mxu0 %v213
  %938 = vmatpush.msra.mxu0 %v207
  %939 = vmatpush.msra.mxu0 %v201
  %940 = vmatpush.msra.mxu0 %v195
  %941 = vmatpush.msra.mxu0 %v189
  %942 = vmatpush.msra.mxu0 %v183
  %943 = vmatpush.msra.mxu0 %v177
  %944 = vmatpush.msra.mxu0 %v171
  %945 = vmatpush.msra.mxu0 %v165
  %946 = vmatpush.msra.mxu0 %v159
  %947 = vmatmul.f32.gmra.mxu0 %v660
  %v948 = vpop.f32.mrf.mxu0
  %v949 = vadd.f32 %v929, %v948
  %950 = vdwg.mxu0
  %951 = vmatpush.msra.mxu0 %v345
  %952 = vmatpush.msra.mxu0 %v339
  %953 = vmatpush.msra.mxu0 %v333
  %954 = vmatpush.msra.mxu0 %v327
  %955 = vmatpush.msra.mxu0 %v321
  %956 = vmatpush.msra.mxu0 %v315
  %957 = vmatpush.msra.mxu0 %v309
  %958 = vmatpush.msra.mxu0 %v303
  %959 = vmatpush.msra.mxu0 %v297
  %960 = vmatpush.msra.mxu0 %v291
  %961 = vmatpush.msra.mxu0 %v285
  %962 = vmatpush.msra.mxu0 %v279
  %963 = vmatpush.msra.mxu0 %v273
  %964 = vmatpush.msra.mxu0 %v267
  %965 = vmatpush.msra.mxu0 %v261
  %966 = vmatpush.msra.mxu0 %v255
  %967 = vmatmul.f32.gmra.mxu0 %v661
  %v968 = vpop.f32.mrf.mxu0
  %v969 = vadd.f32 %v949, %v968
  %970 = vdwg.mxu0
  %971 = vmatpush.msra.mxu0 %v441
  %972 = vmatpush.msra.mxu0 %v435
  %973 = vmatpush.msra.mxu0 %v429
  %974 = vmatpush.msra.mxu0 %v423
  %975 = vmatpush.msra.mxu0 %v417
  %976 = vmatpush.msra.mxu0 %v411
  %977 = vmatpush.msra.mxu0 %v405
  %978 = vmatpush.msra.mxu0 %v399
  %979 = vmatpush.msra.mxu0 %v393
  %980 = vmatpush.msra.mxu0 %v387
  %981 = vmatpush.msra.mxu0 %v381
  %982 = vmatpush.msra.mxu0 %v375
  %983 = vmatpush.msra.mxu0 %v369
  %984 = vmatpush.msra.mxu0 %v363
  %985 = vmatpush.msra.mxu0 %v357
  %986 = vmatpush.msra.mxu0 %v351
  %987 = vmatmul.f32.gmra.mxu0 %v662
  %v988 = vpop.f32.mrf.mxu0
  %v989 = vadd.f32 %v969, %v988
  %990 = vdwg.mxu0
  %991 = vmatpush.msra.mxu0 %v537
  %992 = vmatpush.msra.mxu0 %v531
  %993 = vmatpush.msra.mxu0 %v525
  %994 = vmatpush.msra.mxu0 %v519
  %995 = vmatpush.msra.mxu0 %v513
  %996 = vmatpush.msra.mxu0 %v507
  %997 = vmatpush.msra.mxu0 %v501
  %998 = vmatpush.msra.mxu0 %v495
  %999 = vmatpush.msra.mxu0 %v489
  %1000 = vmatpush.msra.mxu0 %v483
  %1001 = vmatpush.msra.mxu0 %v477
  %1002 = vmatpush.msra.mxu0 %v471
  %1003 = vmatpush.msra.mxu0 %v465
  %1004 = vmatpush.msra.mxu0 %v459
  %1005 = vmatpush.msra.mxu0 %v453
  %1006 = vmatpush.msra.mxu0 %v447
  %1007 = vmatmul.f32.gmra.mxu0 %v663
  %v1008 = vpop.f32.mrf.mxu0
  %v1009 = vadd.f32 %v989, %v1008
  %1010 = vdwg.mxu0
  %1011 = vmatpush.msra.mxu0 %v633
  %1012 = vmatpush.msra.mxu0 %v627
  %1013 = vmatpush.msra.mxu0 %v621
  %1014 = vmatpush.msra.mxu0 %v615
  %1015 = vmatpush.msra.mxu0 %v609
  %1016 = vmatpush.msra.mxu0 %v603
  %1017 = vmatpush.msra.mxu0 %v597
  %1018 = vmatpush.msra.mxu0 %v591
  %1019 = vmatpush.msra.mxu0 %v585
  %1020 = vmatpush.msra.mxu0 %v579
  %1021 = vmatpush.msra.mxu0 %v573
  %1022 = vmatpush.msra.mxu0 %v567
  %1023 = vmatpush.msra.mxu0 %v561
  %1024 = vmatpush.msra.mxu0 %v555
  %1025 = vmatpush.msra.mxu0 %v549
  %1026 = vmatpush.msra.mxu0 %v543
  %1027 = vmatmul.f32.gmra.mxu0 %v664
  %v1028 = vpop.f32.mrf.mxu0
  %v1029 = vadd.f32 %v1009, %v1028
  %1030 = vdwg.mxu0
  %1031 = vmatpush.msra.mxu0 %v154
  %1032 = vmatpush.msra.mxu0 %v148
  %1033 = vmatpush.msra.mxu0 %v142
  %1034 = vmatpush.msra.mxu0 %v136
  %1035 = vmatpush.msra.mxu0 %v130
  %1036 = vmatpush.msra.mxu0 %v124
  %1037 = vmatpush.msra.mxu0 %v118
  %1038 = vmatpush.msra.mxu0 %v112
  %1039 = vmatpush.msra.mxu0 %v106
  %1040 = vmatpush.msra.mxu0 %v100
  %1041 = vmatpush.msra.mxu0 %v94
  %1042 = vmatpush.msra.mxu0 %v88
  %1043 = vmatpush.msra.mxu0 %v82
  %1044 = vmatpush.msra.mxu0 %v76
  %1045 = vmatpush.msra.mxu0 %v70
  %1046 = vmatpush.msra.mxu0 %v64
  %1047 = vmatmul.f32.gmra.mxu0 %v659
  %v1048 = vpop.f32.mrf.mxu0
  %v1049 = vadd.f32 %v642, %v1048
  %1050 = vdwg.mxu0
  %1051 = vmatpush.msra.mxu0 %v250
  %1052 = vmatpush.msra.mxu0 %v244
  %1053 = vmatpush.msra.mxu0 %v238
  %1054 = vmatpush.msra.mxu0 %v232
  %1055 = vmatpush.msra.mxu0 %v226
  %1056 = vmatpush.msra.mxu0 %v220
  %1057 = vmatpush.msra.mxu0 %v214
  %1058 = vmatpush.msra.mxu0 %v208
  %1059 = vmatpush.msra.mxu0 %v202
  %1060 = vmatpush.msra.mxu0 %v196
  %1061 = vmatpush.msra.mxu0 %v190
  %1062 = vmatpush.msra.mxu0 %v184
  %1063 = vmatpush.msra.mxu0 %v178
  %1064 = vmatpush.msra.mxu0 %v172
  %1065 = vmatpush.msra.mxu0 %v166
  %1066 = vmatpush.msra.mxu0 %v160
  %1067 = vmatmul.f32.gmra.mxu0 %v660
  %v1068 = vpop.f32.mrf.mxu0
  %v1069 = vadd.f32 %v1049, %v1068
  %1070 = vdwg.mxu0
  %1071 = vmatpush.msra.mxu0 %v346
  %1072 = vmatpush.msra.mxu0 %v340
  %1073 = vmatpush.msra.mxu0 %v334
  %1074 = vmatpush.msra.mxu0 %v328
  %1075 = vmatpush.msra.mxu0 %v322
  %1076 = vmatpush.msra.mxu0 %v316
  %1077 = vmatpush.msra.mxu0 %v310
  %1078 = vmatpush.msra.mxu0 %v304
  %1079 = vmatpush.msra.mxu0 %v298
  %1080 = vmatpush.msra.mxu0 %v292
  %1081 = vmatpush.msra.mxu0 %v286
  %1082 = vmatpush.msra.mxu0 %v280
  %1083 = vmatpush.msra.mxu0 %v274
  %1084 = vmatpush.msra.mxu0 %v268
  %1085 = vmatpush.msra.mxu0 %v262
  %1086 = vmatpush.msra.mxu0 %v256
  %1087 = vmatmul.f32.gmra.mxu0 %v661
  %v1088 = vpop.f32.mrf.mxu0
  %v1089 = vadd.f32 %v1069, %v1088
  %1090 = vdwg.mxu0
  %1091 = vmatpush.msra.mxu0 %v442
  %1092 = vmatpush.msra.mxu0 %v436
  %1093 = vmatpush.msra.mxu0 %v430
  %1094 = vmatpush.msra.mxu0 %v424
  %1095 = vmatpush.msra.mxu0 %v418
  %1096 = vmatpush.msra.mxu0 %v412
  %1097 = vmatpush.msra.mxu0 %v406
  %1098 = vmatpush.msra.mxu0 %v400
  %1099 = vmatpush.msra.mxu0 %v394
  %1100 = vmatpush.msra.mxu0 %v388
  %1101 = vmatpush.msra.mxu0 %v382
  %1102 = vmatpush.msra.mxu0 %v376
  %1103 = vmatpush.msra.mxu0 %v370
  %1104 = vmatpush.msra.mxu0 %v364
  %1105 = vmatpush.msra.mxu0 %v358
  %1106 = vmatpush.msra.mxu0 %v352
  %1107 = vmatmul.f32.gmra.mxu0 %v662
  %v1108 = vpop.f32.mrf.mxu0
  %v1109 = vadd.f32 %v1089, %v1108
  %1110 = vdwg.mxu0
  %1111 = vmatpush.msra.mxu0 %v538
  %1112 = vmatpush.msra.mxu0 %v532
  %1113 = vmatpush.msra.mxu0 %v526
  %1114 = vmatpush.msra.mxu0 %v520
  %1115 = vmatpush.msra.mxu0 %v514
  %1116 = vmatpush.msra.mxu0 %v508
  %1117 = vmatpush.msra.mxu0 %v502
  %1118 = vmatpush.msra.mxu0 %v496
  %1119 = vmatpush.msra.mxu0 %v490
  %1120 = vmatpush.msra.mxu0 %v484
  %1121 = vmatpush.msra.mxu0 %v478
  %1122 = vmatpush.msra.mxu0 %v472
  %1123 = vmatpush.msra.mxu0 %v466
  %1124 = vmatpush.msra.mxu0 %v460
  %1125 = vmatpush.msra.mxu0 %v454
  %1126 = vmatpush.msra.mxu0 %v448
  %1127 = vmatmul.f32.gmra.mxu0 %v663
  %v1128 = vpop.f32.mrf.mxu0
  %v1129 = vadd.f32 %v1109, %v1128
  %1130 = vdwg.mxu0
  %1131 = vmatpush.msra.mxu0 %v634
  %1132 = vmatpush.msra.mxu0 %v628
  %1133 = vmatpush.msra.mxu0 %v622
  %1134 = vmatpush.msra.mxu0 %v616
  %1135 = vmatpush.msra.mxu0 %v610
  %1136 = vmatpush.msra.mxu0 %v604
  %1137 = vmatpush.msra.mxu0 %v598
  %1138 = vmatpush.msra.mxu0 %v592
  %1139 = vmatpush.msra.mxu0 %v586
  %1140 = vmatpush.msra.mxu0 %v580
  %1141 = vmatpush.msra.mxu0 %v574
  %1142 = vmatpush.msra.mxu0 %v568
  %1143 = vmatpush.msra.mxu0 %v562
  %1144 = vmatpush.msra.mxu0 %v556
  %1145 = vmatpush.msra.mxu0 %v550
  %1146 = vmatpush.msra.mxu0 %v544
  %1147 = vmatmul.f32.gmra.mxu0 %v664
  %v1148 = vpop.f32.mrf.mxu0
  %v1149 = vadd.f32 %v1129, %v1148
  %1150 = vdwg.mxu0
  %1151 = vmatpush.msra.mxu0 %v155
  %1152 = vmatpush.msra.mxu0 %v149
  %1153 = vmatpush.msra.mxu0 %v143
  %1154 = vmatpush.msra.mxu0 %v137
  %1155 = vmatpush.msra.mxu0 %v131
  %1156 = vmatpush.msra.mxu0 %v125
  %1157 = vmatpush.msra.mxu0 %v119
  %1158 = vmatpush.msra.mxu0 %v113
  %1159 = vmatpush.msra.mxu0 %v107
  %1160 = vmatpush.msra.mxu0 %v101
  %1161 = vmatpush.msra.mxu0 %v95
  %1162 = vmatpush.msra.mxu0 %v89
  %1163 = vmatpush.msra.mxu0 %v83
  %1164 = vmatpush.msra.mxu0 %v77
  %1165 = vmatpush.msra.mxu0 %v71
  %1166 = vmatpush.msra.mxu0 %v65
  %1167 = vmatmul.f32.gmra.mxu0 %v659
  %v1168 = vpop.f32.mrf.mxu0
  %v1169 = vadd.f32 %v643, %v1168
  %1170 = vdwg.mxu0
  %1171 = vmatpush.msra.mxu0 %v251
  %1172 = vmatpush.msra.mxu0 %v245
  %1173 = vmatpush.msra.mxu0 %v239
  %1174 = vmatpush.msra.mxu0 %v233
  %1175 = vmatpush.msra.mxu0 %v227
  %1176 = vmatpush.msra.mxu0 %v221
  %1177 = vmatpush.msra.mxu0 %v215
  %1178 = vmatpush.msra.mxu0 %v209
  %1179 = vmatpush.msra.mxu0 %v203
  %1180 = vmatpush.msra.mxu0 %v197
  %1181 = vmatpush.msra.mxu0 %v191
  %1182 = vmatpush.msra.mxu0 %v185
  %1183 = vmatpush.msra.mxu0 %v179
  %1184 = vmatpush.msra.mxu0 %v173
  %1185 = vmatpush.msra.mxu0 %v167
  %1186 = vmatpush.msra.mxu0 %v161
  %1187 = vmatmul.f32.gmra.mxu0 %v660
  %v1188 = vpop.f32.mrf.mxu0
  %v1189 = vadd.f32 %v1169, %v1188
  %1190 = vdwg.mxu0
  %1191 = vmatpush.msra.mxu0 %v347
  %1192 = vmatpush.msra.mxu0 %v341
  %1193 = vmatpush.msra.mxu0 %v335
  %1194 = vmatpush.msra.mxu0 %v329
  %1195 = vmatpush.msra.mxu0 %v323
  %1196 = vmatpush.msra.mxu0 %v317
  %1197 = vmatpush.msra.mxu0 %v311
  %1198 = vmatpush.msra.mxu0 %v305
  %1199 = vmatpush.msra.mxu0 %v299
  %1200 = vmatpush.msra.mxu0 %v293
  %1201 = vmatpush.msra.mxu0 %v287
  %1202 = vmatpush.msra.mxu0 %v281
  %1203 = vmatpush.msra.mxu0 %v275
  %1204 = vmatpush.msra.mxu0 %v269
  %1205 = vmatpush.msra.mxu0 %v263
  %1206 = vmatpush.msra.mxu0 %v257
  %1207 = vmatmul.f32.gmra.mxu0 %v661
  %v1208 = vpop.f32.mrf.mxu0
  %v1209 = vadd.f32 %v1189, %v1208
  %1210 = vdwg.mxu0
  %1211 = vmatpush.msra.mxu0 %v443
  %1212 = vmatpush.msra.mxu0 %v437
  %1213 = vmatpush.msra.mxu0 %v431
  %1214 = vmatpush.msra.mxu0 %v425
  %1215 = vmatpush.msra.mxu0 %v419
  %1216 = vmatpush.msra.mxu0 %v413
  %1217 = vmatpush.msra.mxu0 %v407
  %1218 = vmatpush.msra.mxu0 %v401
  %1219 = vmatpush.msra.mxu0 %v395
  %1220 = vmatpush.msra.mxu0 %v389
  %1221 = vmatpush.msra.mxu0 %v383
  %1222 = vmatpush.msra.mxu0 %v377
  %1223 = vmatpush.msra.mxu0 %v371
  %1224 = vmatpush.msra.mxu0 %v365
  %1225 = vmatpush.msra.mxu0 %v359
  %1226 = vmatpush.msra.mxu0 %v353
  %1227 = vmatmul.f32.gmra.mxu0 %v662
  %v1228 = vpop.f32.mrf.mxu0
  %v1229 = vadd.f32 %v1209, %v1228
  %1230 = vdwg.mxu0
  %1231 = vmatpush.msra.mxu0 %v539
  %1232 = vmatpush.msra.mxu0 %v533
  %1233 = vmatpush.msra.mxu0 %v527
  %1234 = vmatpush.msra.mxu0 %v521
  %1235 = vmatpush.msra.mxu0 %v515
  %1236 = vmatpush.msra.mxu0 %v509
  %1237 = vmatpush.msra.mxu0 %v503
  %1238 = vmatpush.msra.mxu0 %v497
  %1239 = vmatpush.msra.mxu0 %v491
  %1240 = vmatpush.msra.mxu0 %v485
  %1241 = vmatpush.msra.mxu0 %v479
  %1242 = vmatpush.msra.mxu0 %v473
  %1243 = vmatpush.msra.mxu0 %v467
  %1244 = vmatpush.msra.mxu0 %v461
  %1245 = vmatpush.msra.mxu0 %v455
  %1246 = vmatpush.msra.mxu0 %v449
  %1247 = vmatmul.f32.gmra.mxu0 %v663
  %v1248 = vpop.f32.mrf.mxu0
  %v1249 = vadd.f32 %v1229, %v1248
  %1250 = vdwg.mxu0
  %1251 = vmatpush.msra.mxu0 %v635
  %1252 = vmatpush.msra.mxu0 %v629
  %1253 = vmatpush.msra.mxu0 %v623
  %1254 = vmatpush.msra.mxu0 %v617
  %1255 = vmatpush.msra.mxu0 %v611
  %1256 = vmatpush.msra.mxu0 %v605
  %1257 = vmatpush.msra.mxu0 %v599
  %1258 = vmatpush.msra.mxu0 %v593
  %1259 = vmatpush.msra.mxu0 %v587
  %1260 = vmatpush.msra.mxu0 %v581
  %1261 = vmatpush.msra.mxu0 %v575
  %1262 = vmatpush.msra.mxu0 %v569
  %1263 = vmatpush.msra.mxu0 %v563
  %1264 = vmatpush.msra.mxu0 %v557
  %1265 = vmatpush.msra.mxu0 %v551
  %1266 = vmatpush.msra.mxu0 %v545
  %1267 = vmatmul.f32.gmra.mxu0 %v664
  %v1268 = vpop.f32.mrf.mxu0
  %v1269 = vadd.f32 %v1249, %v1268
  %1270 = vdwg.mxu0
  %1271 = vmatpush.msra.mxu0 %v156
  %1272 = vmatpush.msra.mxu0 %v150
  %1273 = vmatpush.msra.mxu0 %v144
  %1274 = vmatpush.msra.mxu0 %v138
  %1275 = vmatpush.msra.mxu0 %v132
  %1276 = vmatpush.msra.mxu0 %v126
  %1277 = vmatpush.msra.mxu0 %v120
  %1278 = vmatpush.msra.mxu0 %v114
  %1279 = vmatpush.msra.mxu0 %v108
  %1280 = vmatpush.msra.mxu0 %v102
  %1281 = vmatpush.msra.mxu0 %v96
  %1282 = vmatpush.msra.mxu0 %v90
  %1283 = vmatpush.msra.mxu0 %v84
  %1284 = vmatpush.msra.mxu0 %v78
  %1285 = vmatpush.msra.mxu0 %v72
  %1286 = vmatpush.msra.mxu0 %v66
  %1287 = vmatmul.f32.gmra.mxu0 %v659
  %v1288 = vpop.f32.mrf.mxu0
  %v1289 = vadd.f32 %v644, %v1288
  %1290 = vdwg.mxu0
  %1291 = vmatpush.msra.mxu0 %v252
  %1292 = vmatpush.msra.mxu0 %v246
  %1293 = vmatpush.msra.mxu0 %v240
  %1294 = vmatpush.msra.mxu0 %v234
  %1295 = vmatpush.msra.mxu0 %v228
  %1296 = vmatpush.msra.mxu0 %v222
  %1297 = vmatpush.msra.mxu0 %v216
  %1298 = vmatpush.msra.mxu0 %v210
  %1299 = vmatpush.msra.mxu0 %v204
  %1300 = vmatpush.msra.mxu0 %v198
  %1301 = vmatpush.msra.mxu0 %v192
  %1302 = vmatpush.msra.mxu0 %v186
  %1303 = vmatpush.msra.mxu0 %v180
  %1304 = vmatpush.msra.mxu0 %v174
  %1305 = vmatpush.msra.mxu0 %v168
  %1306 = vmatpush.msra.mxu0 %v162
  %1307 = vmatmul.f32.gmra.mxu0 %v660
  %v1308 = vpop.f32.mrf.mxu0
  %v1309 = vadd.f32 %v1289, %v1308
  %1310 = vdwg.mxu0
  %1311 = vmatpush.msra.mxu0 %v348
  %1312 = vmatpush.msra.mxu0 %v342
  %1313 = vmatpush.msra.mxu0 %v336
  %1314 = vmatpush.msra.mxu0 %v330
  %1315 = vmatpush.msra.mxu0 %v324
  %1316 = vmatpush.msra.mxu0 %v318
  %1317 = vmatpush.msra.mxu0 %v312
  %1318 = vmatpush.msra.mxu0 %v306
  %1319 = vmatpush.msra.mxu0 %v300
  %1320 = vmatpush.msra.mxu0 %v294
  %1321 = vmatpush.msra.mxu0 %v288
  %1322 = vmatpush.msra.mxu0 %v282
  %1323 = vmatpush.msra.mxu0 %v276
  %1324 = vmatpush.msra.mxu0 %v270
  %1325 = vmatpush.msra.mxu0 %v264
  %1326 = vmatpush.msra.mxu0 %v258
  %1327 = vmatmul.f32.gmra.mxu0 %v661
  %v1328 = vpop.f32.mrf.mxu0
  %v1329 = vadd.f32 %v1309, %v1328
  %1330 = vdwg.mxu0
  %1331 = vmatpush.msra.mxu0 %v444
  %1332 = vmatpush.msra.mxu0 %v438
  %1333 = vmatpush.msra.mxu0 %v432
  %1334 = vmatpush.msra.mxu0 %v426
  %1335 = vmatpush.msra.mxu0 %v420
  %1336 = vmatpush.msra.mxu0 %v414
  %1337 = vmatpush.msra.mxu0 %v408
  %1338 = vmatpush.msra.mxu0 %v402
  %1339 = vmatpush.msra.mxu0 %v396
  %1340 = vmatpush.msra.mxu0 %v390
  %1341 = vmatpush.msra.mxu0 %v384
  %1342 = vmatpush.msra.mxu0 %v378
  %1343 = vmatpush.msra.mxu0 %v372
  %1344 = vmatpush.msra.mxu0 %v366
  %1345 = vmatpush.msra.mxu0 %v360
  %1346 = vmatpush.msra.mxu0 %v354
  %1347 = vmatmul.f32.gmra.mxu0 %v662
  %v1348 = vpop.f32.mrf.mxu0
  %v1349 = vadd.f32 %v1329, %v1348
  %1350 = vdwg.mxu0
  %1351 = vmatpush.msra.mxu0 %v540
  %1352 = vmatpush.msra.mxu0 %v534
  %1353 = vmatpush.msra.mxu0 %v528
  %1354 = vmatpush.msra.mxu0 %v522
  %1355 = vmatpush.msra.mxu0 %v516
  %1356 = vmatpush.msra.mxu0 %v510
  %1357 = vmatpush.msra.mxu0 %v504
  %1358 = vmatpush.msra.mxu0 %v498
  %1359 = vmatpush.msra.mxu0 %v492
  %1360 = vmatpush.msra.mxu0 %v486
  %1361 = vmatpush.msra.mxu0 %v480
  %1362 = vmatpush.msra.mxu0 %v474
  %1363 = vmatpush.msra.mxu0 %v468
  %1364 = vmatpush.msra.mxu0 %v462
  %1365 = vmatpush.msra.mxu0 %v456
  %1366 = vmatpush.msra.mxu0 %v450
  %1367 = vmatmul.f32.gmra.mxu0 %v663
  %v1368 = vpop.f32.mrf.mxu0
  %v1369 = vadd.f32 %v1349, %v1368
  %1370 = vdwg.mxu0
  %1371 = vmatpush.msra.mxu0 %v636
  %1372 = vmatpush.msra.mxu0 %v630
  %1373 = vmatpush.msra.mxu0 %v624
  %1374 = vmatpush.msra.mxu0 %v618
  %1375 = vmatpush.msra.mxu0 %v612
  %1376 = vmatpush.msra.mxu0 %v606
  %1377 = vmatpush.msra.mxu0 %v600
  %1378 = vmatpush.msra.mxu0 %v594
  %1379 = vmatpush.msra.mxu0 %v588
  %1380 = vmatpush.msra.mxu0 %v582
  %1381 = vmatpush.msra.mxu0 %v576
  %1382 = vmatpush.msra.mxu0 %v570
  %1383 = vmatpush.msra.mxu0 %v564
  %1384 = vmatpush.msra.mxu0 %v558
  %1385 = vmatpush.msra.mxu0 %v552
  %1386 = vmatpush.msra.mxu0 %v546
  %1387 = vmatmul.f32.gmra.mxu0 %v664
  %v1388 = vpop.f32.mrf.mxu0
  %v1389 = vadd.f32 %v1369, %v1388
  %1390 = vdwg.mxu0
  %v1391 = vtanh.pop %v789
  %v1392 = vtanh.pop %v909
  %v1393 = vtanh.pop %v1029
  %v1394 = vtanh.pop %v1149
  %v1395 = vtanh.pop %v1269
  %v1396 = vtanh.pop %v1389
  %v1397 = vld [vmem:[%s1] sm:$0xf]
  %v1398 = vld [vmem:[%s4] sm:$0xff]
  %v1399 = vld [vmem:[%s4 + $0x8] sm:$0xff]
  %v1400 = vld [vmem:[%s4 + $0x10] sm:$0xff]
  %v1401 = vld [vmem:[%s4 + $0x18] sm:$0xff]
  %v1402 = vld [vmem:[%s4 + $0x20] sm:$0xff]
  %v1403 = vld [vmem:[%s4 + $0x28] sm:$0xff]
  %v1404 = vld [vmem:[%s4 + $0x30] sm:$0xff]
  %v1405 = vld [vmem:[%s4 + $0x38] sm:$0xff]
  %v1406 = vld [vmem:[%s4 + $0x40] sm:$0xff]
  %v1407 = vld [vmem:[%s4 + $0x48] sm:$0xff]
  %v1408 = vld [vmem:[%s4 + $0x50] sm:$0xff]
  %v1409 = vld [vmem:[%s4 + $0x58] sm:$0xff]
  %v1410 = vld [vmem:[%s4 + $0x60] sm:$0xff]
  %v1411 = vld [vmem:[%s4 + $0x68] sm:$0xff]
  %v1412 = vld [vmem:[%s4 + $0x70] sm:$0xff]
  %v1413 = vld [vmem:[%s4 + $0x78] sm:$0xff]
  %v1414 = vld [vmem:[%s4 + $0x80] sm:$0xff]
  %v1415 = vld [vmem:[%s4 + $0x88] sm:$0xff]
  %v1416 = vld [vmem:[%s4 + $0x90] sm:$0xff]
  %v1417 = vld [vmem:[%s4 + $0x98] sm:$0xff]
  %v1418 = vld [vmem:[%s4 + $0xa0] sm:$0xff]
  %v1419 = vld [vmem:[%s4 + $0xa8] sm:$0xff]
  %v1420 = vld [vmem:[%s4 + $0xb0] sm:$0xff]
  %v1421 = vld [vmem:[%s4 + $0xb8] sm:$0xff]
  %v1422 = vld [vmem:[%s4 + $0xc0] sm:$0xff]
  %v1423 = vld [vmem:[%s4 + $0xc8] sm:$0xff]
  %v1424 = vld [vmem:[%s4 + $0xd0] sm:$0xff]
  %v1425 = vld [vmem:[%s4 + $0xd8] sm:$0xff]
  %v1426 = vld [vmem:[%s4 + $0xe0] sm:$0xff]
  %v1427 = vld [vmem:[%s4 + $0xe8] sm:$0xff]
  %v1428 = vld [vmem:[%s5] sm:$0x3f]
  %v1430 = vperm.slane %v1428, 0
  %v1431 = vperm.slane %v1428, 1
  %v1432 = vperm.slane %v1428, 2
  %v1433 = vperm.slane %v1428, 3
  %v1434 = vperm.slane %v1428, 4
  %v1435 = vperm.slane %v1428, 5
  %vm1442 = vcmask 326656
  %v1444 = vsel %vm1442, %v1397, 0
  %1446 = vmatpush.msra.mxu0 0.0
  %1447 = vmatpush.msra.mxu0 0.0
  %1448 = vmatpush.msra.mxu0 0.0
  %1449 = vmatpush.msra.mxu0 0.0
  %1450 = vmatpush.msra.mxu0 0.0
  %1451 = vmatpush.msra.mxu0 0.0
  %1452 = vmatpush.msra.mxu0 0.0
  %1453 = vmatpush.msra.mxu0 0.0
  %1454 = vmatpush.msra.mxu0 0.0
  %1455 = vmatpush.msra.mxu0 0.0
  %1456 = vmatpush.msra.mxu0 0.0
  %1457 = vmatpush.msra.mxu0 %v1422
  %1458 = vmatpush.msra.mxu0 %v1416
  %1459 = vmatpush.msra.mxu0 %v1410
  %1460 = vmatpush.msra.mxu0 %v1404
  %1461 = vmatpush.msra.mxu0 %v1398
  %1462 = vmatmul.f32.gmra.mxu0 %v1444
  %v1463 = vpop.f32.mrf.mxu0
  %v1464 = vadd.f32 %v1430, %v1463
  %1465 = vdwg.mxu0
  %1466 = vmatpush.msra.mxu0 0.0
  %1467 = vmatpush.msra.mxu0 0.0
  %1468 = vmatpush.msra.mxu0 0.0
  %1469 = vmatpush.msra.mxu0 0.0
  %1470 = vmatpush.msra.mxu0 0.0
  %1471 = vmatpush.msra.mxu0 0.0
  %1472 = vmatpush.msra.mxu0 0.0
  %1473 = vmatpush.msra.mxu0 0.0
  %1474 = vmatpush.msra.mxu0 0.0
  %1475 = vmatpush.msra.mxu0 0.0
  %1476 = vmatpush.msra.mxu0 0.0
  %1477 = vmatpush.msra.mxu0 %v1423
  %1478 = vmatpush.msra.mxu0 %v1417
  %1479 = vmatpush.msra.mxu0 %v1411
  %1480 = vmatpush.msra.mxu0 %v1405
  %1481 = vmatpush.msra.mxu0 %v1399
  %1482 = vmatmul.f32.gmra.mxu0 %v1444
  %v1483 = vpop.f32.mrf.mxu0
  %v1484 = vadd.f32 %v1431, %v1483
  %1485 = vdwg.mxu0
  %1486 = vmatpush.msra.mxu0 0.0
  %1487 = vmatpush.msra.mxu0 0.0
  %1488 = vmatpush.msra.mxu0 0.0
  %1489 = vmatpush.msra.mxu0 0.0
  %1490 = vmatpush.msra.mxu0 0.0
  %1491 = vmatpush.msra.mxu0 0.0
  %1492 = vmatpush.msra.mxu0 0.0
  %1493 = vmatpush.msra.mxu0 0.0
  %1494 = vmatpush.msra.mxu0 0.0
  %1495 = vmatpush.msra.mxu0 0.0
  %1496 = vmatpush.msra.mxu0 0.0
  %1497 = vmatpush.msra.mxu0 %v1424
  %1498 = vmatpush.msra.mxu0 %v1418
  %1499 = vmatpush.msra.mxu0 %v1412
  %1500 = vmatpush.msra.mxu0 %v1406
  %1501 = vmatpush.msra.mxu0 %v1400
  %1502 = vmatmul.f32.gmra.mxu0 %v1444
  %v1503 = vpop.f32.mrf.mxu0
  %v1504 = vadd.f32 %v1432, %v1503
  %1505 = vdwg.mxu0
  %1506 = vmatpush.msra.mxu0 0.0
  %1507 = vmatpush.msra.mxu0 0.0
  %1508 = vmatpush.msra.mxu0 0.0
  %1509 = vmatpush.msra.mxu0 0.0
  %1510 = vmatpush.msra.mxu0 0.0
  %1511 = vmatpush.msra.mxu0 0.0
  %1512 = vmatpush.msra.mxu0 0.0
  %1513 = vmatpush.msra.mxu0 0.0
  %1514 = vmatpush.msra.mxu0 0.0
  %1515 = vmatpush.msra.mxu0 0.0
  %1516 = vmatpush.msra.mxu0 0.0
  %1517 = vmatpush.msra.mxu0 %v1425
  %1518 = vmatpush.msra.mxu0 %v1419
  %1519 = vmatpush.msra.mxu0 %v1413
  %1520 = vmatpush.msra.mxu0 %v1407
  %1521 = vmatpush.msra.mxu0 %v1401
  %1522 = vmatmul.f32.gmra.mxu0 %v1444
  %v1523 = vpop.f32.mrf.mxu0
  %v1524 = vadd.f32 %v1433, %v1523
  %1525 = vdwg.mxu0
  %1526 = vmatpush.msra.mxu0 0.0
  %1527 = vmatpush.msra.mxu0 0.0
  %1528 = vmatpush.msra.mxu0 0.0
  %1529 = vmatpush.msra.mxu0 0.0
  %1530 = vmatpush.msra.mxu0 0.0
  %1531 = vmatpush.msra.mxu0 0.0
  %1532 = vmatpush.msra.mxu0 0.0
  %1533 = vmatpush.msra.mxu0 0.0
  %1534 = vmatpush.msra.mxu0 0.0
  %1535 = vmatpush.msra.mxu0 0.0
  %1536 = vmatpush.msra.mxu0 0.0
  %1537 = vmatpush.msra.mxu0 %v1426
  %1538 = vmatpush.msra.mxu0 %v1420
  %1539 = vmatpush.msra.mxu0 %v1414
  %1540 = vmatpush.msra.mxu0 %v1408
  %1541 = vmatpush.msra.mxu0 %v1402
  %1542 = vmatmul.f32.gmra.mxu0 %v1444
  %v1543 = vpop.f32.mrf.mxu0
  %v1544 = vadd.f32 %v1434, %v1543
  %1545 = vdwg.mxu0
  %1546 = vmatpush.msra.mxu0 0.0
  %1547 = vmatpush.msra.mxu0 0.0
  %1548 = vmatpush.msra.mxu0 0.0
  %1549 = vmatpush.msra.mxu0 0.0
  %1550 = vmatpush.msra.mxu0 0.0
  %1551 = vmatpush.msra.mxu0 0.0
  %1552 = vmatpush.msra.mxu0 0.0
  %1553 = vmatpush.msra.mxu0 0.0
  %1554 = vmatpush.msra.mxu0 0.0
  %1555 = vmatpush.msra.mxu0 0.0
  %1556 = vmatpush.msra.mxu0 0.0
  %1557 = vmatpush.msra.mxu0 %v1427
  %1558 = vmatpush.msra.mxu0 %v1421
  %1559 = vmatpush.msra.mxu0 %v1415
  %1560 = vmatpush.msra.mxu0 %v1409
  %1561 = vmatpush.msra.mxu0 %v1403
  %1562 = vmatmul.f32.gmra.mxu0 %v1444
  %v1563 = vpop.f32.mrf.mxu0
  %v1564 = vadd.f32 %v1435, %v1563
  %1565 = vdwg.mxu0
  %vm1566 = vcmask 1043456
  %v1567 = vsel %vm1566, %v1391, 0.0
  %v1568 = vsel %vm1566, %v1392, 0.0
  %v1569 = vadd.f32 %v1567, %v1568
  %v1570 = vsel %vm1566, %v1393, 0.0
  %v1571 = vadd.f32 %v1569, %v1570
  %v1572 = vsel %vm1566, %v1394, 0.0
  %v1573 = vadd.f32 %v1571, %v1572
  %v1574 = vsel %vm1566, %v1395, 0.0
  %v1575 = vadd.f32 %v1573, %v1574
  %v1576 = vsel %vm1566, %v1396, 0.0
  %v1577 = vadd.f32 %v1575, %v1576
  %1578 = vadd.xlane.f32.xlu0 %v1577
  %v1579 = vpop.xlane.xlu0 %1578
  %v1580 = vrot.slane %v1579, 4
  %v1581 = vadd.f32 %v1579, %v1580
  %v1582 = vrot.slane %v1581, 2
  %v1583 = vadd.f32 %v1581, %v1582
  %v1584 = vrot.slane %v1583, 1
  %v1585 = vadd.f32 %v1583, %v1584
  %s1586 = vtos %v1585
  %v1587 = vsel %vm1566, %v1464, 0.0
  %v1588 = vsel %vm1566, %v1484, 0.0
  %v1589 = vadd.f32 %v1587, %v1588
  %v1590 = vsel %vm1566, %v1504, 0.0
  %v1591 = vadd.f32 %v1589, %v1590
  %v1592 = vsel %vm1566, %v1524, 0.0
  %v1593 = vadd.f32 %v1591, %v1592
  %v1594 = vsel %vm1566, %v1544, 0.0
  %v1595 = vadd.f32 %v1593, %v1594
  %v1596 = vsel %vm1566, %v1564, 0.0
  %v1597 = vadd.f32 %v1595, %v1596
  %1598 = vadd.xlane.f32.xlu0 %v1597
  %v1599 = vpop.xlane.xlu0 %1598
  %v1600 = vrot.slane %v1599, 4
  %v1601 = vadd.f32 %v1599, %v1600
  %v1602 = vrot.slane %v1601, 2
  %v1603 = vadd.f32 %v1601, %v1602
  %v1604 = vrot.slane %v1603, 1
  %v1605 = vadd.f32 %v1603, %v1604
  %s1606 = vtos %v1605
  %s1607 = sadd.f32 %s1586, %s1606
  %v1608 = vmul.f32 %v1391, %v1391
  %v1609 = vmul.f32 %v1392, %v1392
  %v1610 = vmul.f32 %v1393, %v1393
  %v1611 = vmul.f32 %v1394, %v1394
  %v1612 = vmul.f32 %v1395, %v1395
  %v1613 = vmul.f32 %v1396, %v1396
  %v1614 = vsel %vm1566, %v1608, 0.0
  %v1615 = vsel %vm1566, %v1609, 0.0
  %v1616 = vadd.f32 %v1614, %v1615
  %v1617 = vsel %vm1566, %v1610, 0.0
  %v1618 = vadd.f32 %v1616, %v1617
  %v1619 = vsel %vm1566, %v1611, 0.0
  %v1620 = vadd.f32 %v1618, %v1619
  %v1621 = vsel %vm1566, %v1612, 0.0
  %v1622 = vadd.f32 %v1620, %v1621
  %v1623 = vsel %vm1566, %v1613, 0.0
  %v1624 = vadd.f32 %v1622, %v1623
  %1625 = vadd.xlane.f32.xlu0 %v1624
  %v1626 = vpop.xlane.xlu0 %1625
  %v1627 = vrot.slane %v1626, 4
  %v1628 = vadd.f32 %v1626, %v1627
  %v1629 = vrot.slane %v1628, 2
  %v1630 = vadd.f32 %v1628, %v1629
  %v1631 = vrot.slane %v1630, 1
  %v1632 = vadd.f32 %v1630, %v1631
  %s1633 = vtos %v1632
  %v1634 = vmul.f32 %v1464, %v1464
  %v1635 = vmul.f32 %v1484, %v1484
  %v1636 = vmul.f32 %v1504, %v1504
  %v1637 = vmul.f32 %v1524, %v1524
  %v1638 = vmul.f32 %v1544, %v1544
  %v1639 = vmul.f32 %v1564, %v1564
  %v1640 = vsel %vm1566, %v1634, 0.0
  %v1641 = vsel %vm1566, %v1635, 0.0
  %v1642 = vadd.f32 %v1640, %v1641
  %v1643 = vsel %vm1566, %v1636, 0.0
  %v1644 = vadd.f32 %v1642, %v1643
  %v1645 = vsel %vm1566, %v1637, 0.0
  %v1646 = vadd.f32 %v1644, %v1645
  %v1647 = vsel %vm1566, %v1638, 0.0
  %v1648 = vadd.f32 %v1646, %v1647
  %v1649 = vsel %vm1566, %v1639, 0.0
  %v1650 = vadd.f32 %v1648, %v1649
  %1651 = vadd.xlane.f32.xlu0 %v1650
  %v1652 = vpop.xlane.xlu0 %1651
  %v1653 = vrot.slane %v1652, 4
  %v1654 = vadd.f32 %v1652, %v1653
  %v1655 = vrot.slane %v1654, 2
  %v1656 = vadd.f32 %v1654, %v1655
  %v1657 = vrot.slane %v1656, 1
  %v1658 = vadd.f32 %v1656, %v1657
  %s1659 = vtos %v1658
  %s1660 = sadd.f32 %s1633, %s1659
  %v1661 = vrcp.pop 6144.0
  %v1662 = vmul.f32 6144.0, %v1661
  %v1663 = vsub.f32 1.0, %v1662
  %v1664 = vmul.f32 %v1661, %v1663
  %v1665 = vadd.f32 %v1661, %v1664
  %vm1666 = vweird.f32 %v1661
  %v1667 = vsel %vm1666, %v1661, %v1665
  %s1668 = vtos %v1667
  %s1669 = smul.f32 %s1607, %s1668
  %v1670 = vrcp.pop 6144.0
  %v1671 = vmul.f32 6144.0, %v1670
  %v1672 = vsub.f32 1.0, %v1671
  %v1673 = vmul.f32 %v1670, %v1672
  %v1674 = vadd.f32 %v1670, %v1673
  %vm1675 = vweird.f32 %v1670
  %v1676 = vsel %vm1675, %v1670, %v1674
  %s1677 = vtos %v1676
  %s1678 = smul.f32 %s1660, %s1677
  %s1679 = smul.f32 %s1669, %s1669
  %s1680 = ssub.f32 %s1678, %s1679
  %s1681 = sadd.f32 %s1680, 1e-05
  %v1682 = vstv %s1681
  %v1683 = vrsqrt.pop %v1682
  %v1684 = vmul.f32 %v1683, %v1682
  %v1685 = vmul.f32 %v1684, %v1683
  %v1686 = vmul.f32 0.5, %v1685
  %v1687 = vsub.f32 1.5, %v1686
  %v1688 = vmul.f32 %v1683, %v1687
  %vm1689 = vweird.f32 %v1682
  %vm1690 = vweird.f32 %v1683
  %vm1691 = vmor %vm1689, %vm1690
  %v1692 = vsel %vm1691, %v1683, %v1688
  %s1693 = vtos %v1692
  %v1694 = vstv %s1669
  %v1695 = vsub.f32 %v1391, %v1694
  %v1696 = vsub.f32 %v1392, %v1694
  %v1697 = vsub.f32 %v1393, %v1694
  %v1698 = vsub.f32 %v1394, %v1694
  %v1699 = vsub.f32 %v1395, %v1694
  %v1700 = vsub.f32 %v1396, %v1694
  %v1701 = vstv %s1693
  %v1702 = vmul.f32 %v1695, %v1701
  %v1703 = vmul.f32 %v1696, %v1701
  %v1704 = vmul.f32 %v1697, %v1701
  %v1705 = vmul.f32 %v1698, %v1701
  %v1706 = vmul.f32 %v1699, %v1701
  %v1707 = vmul.f32 %v1700, %v1701
  %v1708 = vld [vmem:[%s6] sm:$0xff]
  %v1709 = vld [vmem:[%s6 + $0x8] sm:$0xff]
  %v1710 = vld [vmem:[%s6 + $0x10] sm:$0xff]
  %1714 = vst [vmem:[#allocation1] ss:$2 sm:$0xff] %v1708
  %s1715 = scalar_lea.vmem [#allocation1], 16
  %1716 = vst [vmem:[%s1715] ss:$2 sm:$0xff] %v1709
  %s1717 = scalar_lea.vmem [#allocation1], 32
  %1718 = vst [vmem:[%s1717] ss:$2 sm:$0xff] %v1710
  %v1719 = vld.sshfl [vmem:[#allocation1] sm:$0xff pattern:$0x75316420]
  %v1720 = vld.sshfl [vmem:[#allocation1 + $0x8] sm:$0xff pattern:$0x75316420]
  %v1721 = vld.sshfl [vmem:[#allocation1 + $0x10] sm:$0xff pattern:$0x75316420]
  %v1722 = vld.sshfl [vmem:[#allocation1 + $0x18] sm:$0xff pattern:$0x75316420]
  %v1723 = vld.sshfl [vmem:[#allocation1 + $0x20] sm:$0xff pattern:$0x75316420]
  %v1724 = vld.sshfl [vmem:[#allocation1 + $0x28] sm:$0xff pattern:$0x75316420]
  %v1731 = vmul.f32 %v1702, %v1719
  %v1732 = vmul.f32 %v1703, %v1720
  %v1733 = vmul.f32 %v1704, %v1721
  %v1734 = vmul.f32 %v1705, %v1722
  %v1735 = vmul.f32 %v1706, %v1723
  %v1736 = vmul.f32 %v1707, %v1724
  %v1737 = vld [vmem:[%s7] sm:$0xff]
  %v1738 = vld [vmem:[%s7 + $0x8] sm:$0xff]
  %v1739 = vld [vmem:[%s7 + $0x10] sm:$0xff]
  %1743 = vst [vmem:[#allocation1] ss:$2 sm:$0xff] %v1737
  %s1744 = scalar_lea.vmem [#allocation1], 16
  %1745 = vst [vmem:[%s1744] ss:$2 sm:$0xff] %v1738
  %s1746 = scalar_lea.vmem [#allocation1], 32
  %1747 = vst [vmem:[%s1746] ss:$2 sm:$0xff] %v1739
  %v1748 = vld.sshfl [vmem:[#allocation1] sm:$0xff pattern:$0x75316420]
  %v1749 = vld.sshfl [vmem:[#allocation1 + $0x8] sm:$0xff pattern:$0x75316420]
  %v1750 = vld.sshfl [vmem:[#allocation1 + $0x10] sm:$0xff pattern:$0x75316420]
  %v1751 = vld.sshfl [vmem:[#allocation1 + $0x18] sm:$0xff pattern:$0x75316420]
  %v1752 = vld.sshfl [vmem:[#allocation1 + $0x20] sm:$0xff pattern:$0x75316420]
  %v1753 = vld.sshfl [vmem:[#allocation1 + $0x28] sm:$0xff pattern:$0x75316420]
  %v1760 = vadd.f32 %v1731, %v1748
  %v1761 = vadd.f32 %v1732, %v1749
  %v1762 = vadd.f32 %v1733, %v1750
  %v1763 = vadd.f32 %v1734, %v1751
  %v1764 = vadd.f32 %v1735, %v1752
  %v1765 = vadd.f32 %v1736, %v1753
  %v1766 = vsub.f32 %v1464, %v1694
  %v1767 = vsub.f32 %v1484, %v1694
  %v1768 = vsub.f32 %v1504, %v1694
  %v1769 = vsub.f32 %v1524, %v1694
  %v1770 = vsub.f32 %v1544, %v1694
  %v1771 = vsub.f32 %v1564, %v1694
  %v1772 = vmul.f32 %v1766, %v1701
  %v1773 = vmul.f32 %v1767, %v1701
  %v1774 = vmul.f32 %v1768, %v1701
  %v1775 = vmul.f32 %v1769, %v1701
  %v1776 = vmul.f32 %v1770, %v1701
  %v1777 = vmul.f32 %v1771, %v1701
  %v1778 = vld [vmem:[%s8] sm:$0xff]
  %v1779 = vld [vmem:[%s8 + $0x8] sm:$0xff]
  %v1780 = vld [vmem:[%s8 + $0x10] sm:$0xff]
  %1784 = vst [vmem:[#allocation1] ss:$2 sm:$0xff] %v1778
  %s1785 = scalar_lea.vmem [#allocation1], 16
  %1786 = vst [vmem:[%s1785] ss:$2 sm:$0xff] %v1779
  %s1787 = scalar_lea.vmem [#allocation1], 32
  %1788 = vst [vmem:[%s1787] ss:$2 sm:$0xff] %v1780
  %v1789 = vld.sshfl [vmem:[#allocation1] sm:$0xff pattern:$0x75316420]
  %v1790 = vld.sshfl [vmem:[#allocation1 + $0x8] sm:$0xff pattern:$0x75316420]
  %v1791 = vld.sshfl [vmem:[#allocation1 + $0x10] sm:$0xff pattern:$0x75316420]
  %v1792 = vld.sshfl [vmem:[#allocation1 + $0x18] sm:$0xff pattern:$0x75316420]
  %v1793 = vld.sshfl [vmem:[#allocation1 + $0x20] sm:$0xff pattern:$0x75316420]
  %v1794 = vld.sshfl [vmem:[#allocation1 + $0x28] sm:$0xff pattern:$0x75316420]
  %v1801 = vmul.f32 %v1772, %v1789
  %v1802 = vmul.f32 %v1773, %v1790
  %v1803 = vmul.f32 %v1774, %v1791
  %v1804 = vmul.f32 %v1775, %v1792
  %v1805 = vmul.f32 %v1776, %v1793
  %v1806 = vmul.f32 %v1777, %v1794
  %v1807 = vld [vmem:[%s9] sm:$0xff]
  %v1808 = vld [vmem:[%s9 + $0x8] sm:$0xff]
  %v1809 = vld [vmem:[%s9 + $0x10] sm:$0xff]
  %1813 = vst [vmem:[#allocation1] ss:$2 sm:$0xff] %v1807
  %s1814 = scalar_lea.vmem [#allocation1], 16
  %1815 = vst [vmem:[%s1814] ss:$2 sm:$0xff] %v1808
  %s1816 = scalar_lea.vmem [#allocation1], 32
  %1817 = vst [vmem:[%s1816] ss:$2 sm:$0xff] %v1809
  %v1818 = vld.sshfl [vmem:[#allocation1] sm:$0xff pattern:$0x75316420]
  %v1819 = vld.sshfl [vmem:[#allocation1 + $0x8] sm:$0xff pattern:$0x75316420]
  %v1820 = vld.sshfl [vmem:[#allocation1 + $0x10] sm:$0xff pattern:$0x75316420]
  %v1821 = vld.sshfl [vmem:[#allocation1 + $0x18] sm:$0xff pattern:$0x75316420]
  %v1822 = vld.sshfl [vmem:[#allocation1 + $0x20] sm:$0xff pattern:$0x75316420]
  %v1823 = vld.sshfl [vmem:[#allocation1 + $0x28] sm:$0xff pattern:$0x75316420]
  %v1830 = vadd.f32 %v1801, %v1818
  %v1831 = vadd.f32 %v1802, %v1819
  %v1832 = vadd.f32 %v1803, %v1820
  %v1833 = vadd.f32 %v1804, %v1821
  %v1834 = vadd.f32 %v1805, %v1822
  %v1835 = vadd.f32 %v1806, %v1823
  %v1836 = vld [vmem:[%s10] sm:$0xff]
  %v1837 = vld [vmem:[%s10 + $0x8] sm:$0xff]
  %v1838 = vld [vmem:[%s10 + $0x10] sm:$0xff]
  %v1839 = vld [vmem:[%s10 + $0x18] sm:$0xff]
  %v1840 = vld [vmem:[%s10 + $0x20] sm:$0xff]
  %v1841 = vld [vmem:[%s10 + $0x28] sm:$0xff]
  %v1842 = vld [vmem:[%s10 + $0x30] sm:$0xff]
  %v1843 = vld [vmem:[%s10 + $0x38] sm:$0xff]
  %v1844 = vld [vmem:[%s10 + $0x40] sm:$0xff]
  %v1845 = vld [vmem:[%s10 + $0x48] sm:$0xff]
  %v1846 = vld [vmem:[%s10 + $0x50] sm:$0xff]
  %v1847 = vld [vmem:[%s10 + $0x58] sm:$0xff]
  %v1848 = vld [vmem:[%s10 + $0x60] sm:$0xff]
  %v1849 = vld [vmem:[%s10 + $0x68] sm:$0xff]
  %v1850 = vld [vmem:[%s10 + $0x70] sm:$0xff]
  %v1851 = vld [vmem:[%s10 + $0x78] sm:$0xff]
  %v1852 = vld [vmem:[%s10 + $0x80] sm:$0xff]
  %v1853 = vld [vmem:[%s10 + $0x88] sm:$0xff]
  %v1854 = vld [vmem:[%s10 + $0x90] sm:$0xff]
  %v1855 = vld [vmem:[%s10 + $0x98] sm:$0xff]
  %v1856 = vld [vmem:[%s10 + $0xa0] sm:$0xff]
  %v1857 = vld [vmem:[%s10 + $0xa8] sm:$0xff]
  %v1858 = vld [vmem:[%s10 + $0xb0] sm:$0xff]
  %v1859 = vld [vmem:[%s10 + $0xb8] sm:$0xff]
  %v1860 = vld [vmem:[%s10 + $0xc0] sm:$0xff]
  %v1861 = vld [vmem:[%s10 + $0xc8] sm:$0xff]
  %v1862 = vld [vmem:[%s10 + $0xd0] sm:$0xff]
  %v1863 = vld [vmem:[%s10 + $0xd8] sm:$0xff]
  %v1864 = vld [vmem:[%s10 + $0xe0] sm:$0xff]
  %v1865 = vld [vmem:[%s10 + $0xe8] sm:$0xff]
  %v1866 = vld [vmem:[%s10 + $0xf0] sm:$0xff]
  %v1867 = vld [vmem:[%s10 + $0xf8] sm:$0xff]
  %v1868 = vld [vmem:[%s10 + $0x100] sm:$0xff]
  %v1869 = vld [vmem:[%s10 + $0x108] sm:$0xff]
  %v1870 = vld [vmem:[%s10 + $0x110] sm:$0xff]
  %v1871 = vld [vmem:[%s10 + $0x118] sm:$0xff]
  %v1872 = vld [vmem:[%s10 + $0x120] sm:$0xff]
  %v1873 = vld [vmem:[%s10 + $0x128] sm:$0xff]
  %v1874 = vld [vmem:[%s10 + $0x130] sm:$0xff]
  %v1875 = vld [vmem:[%s10 + $0x138] sm:$0xff]
  %v1876 = vld [vmem:[%s10 + $0x140] sm:$0xff]
  %v1877 = vld [vmem:[%s10 + $0x148] sm:$0xff]
  %v1878 = vld [vmem:[%s10 + $0x150] sm:$0xff]
  %v1879 = vld [vmem:[%s10 + $0x158] sm:$0xff]
  %v1880 = vld [vmem:[%s10 + $0x160] sm:$0xff]
  %v1881 = vld [vmem:[%s10 + $0x168] sm:$0xff]
  %v1882 = vld [vmem:[%s10 + $0x170] sm:$0xff]
  %v1883 = vld [vmem:[%s10 + $0x178] sm:$0xff]
  %v1884 = vld [vmem:[%s10 + $0x180] sm:$0xff]
  %v1885 = vld [vmem:[%s10 + $0x188] sm:$0xff]
  %v1886 = vld [vmem:[%s10 + $0x190] sm:$0xff]
  %v1887 = vld [vmem:[%s10 + $0x198] sm:$0xff]
  %v1888 = vld [vmem:[%s10 + $0x1a0] sm:$0xff]
  %v1889 = vld [vmem:[%s10 + $0x1a8] sm:$0xff]
  %v1890 = vld [vmem:[%s10 + $0x1b0] sm:$0xff]
  %v1891 = vld [vmem:[%s10 + $0x1b8] sm:$0xff]
  %v1892 = vld [vmem:[%s10 + $0x1c0] sm:$0xff]
  %v1893 = vld [vmem:[%s10 + $0x1c8] sm:$0xff]
  %v1894 = vld [vmem:[%s10 + $0x1d0] sm:$0xff]
  %v1895 = vld [vmem:[%s10 + $0x1d8] sm:$0xff]
  %v1896 = vld [vmem:[%s10 + $0x1e0] sm:$0xff]
  %v1897 = vld [vmem:[%s10 + $0x1e8] sm:$0xff]
  %v1898 = vld [vmem:[%s10 + $0x1f0] sm:$0xff]
  %v1899 = vld [vmem:[%s10 + $0x1f8] sm:$0xff]
  %v1900 = vld [vmem:[%s10 + $0x200] sm:$0xff]
  %v1901 = vld [vmem:[%s10 + $0x208] sm:$0xff]
  %v1902 = vld [vmem:[%s10 + $0x210] sm:$0xff]
  %v1903 = vld [vmem:[%s10 + $0x218] sm:$0xff]
  %v1904 = vld [vmem:[%s10 + $0x220] sm:$0xff]
  %v1905 = vld [vmem:[%s10 + $0x228] sm:$0xff]
  %v1906 = vld [vmem:[%s10 + $0x230] sm:$0xff]
  %v1907 = vld [vmem:[%s10 + $0x238] sm:$0xff]
  %v1908 = vld [vmem:[%s10 + $0x240] sm:$0xff]
  %v1909 = vld [vmem:[%s10 + $0x248] sm:$0xff]
  %v1910 = vld [vmem:[%s10 + $0x250] sm:$0xff]
  %v1911 = vld [vmem:[%s10 + $0x258] sm:$0xff]
  %v1912 = vld [vmem:[%s10 + $0x260] sm:$0xff]
  %v1913 = vld [vmem:[%s10 + $0x268] sm:$0xff]
  %v1914 = vld [vmem:[%s10 + $0x270] sm:$0xff]
  %v1915 = vld [vmem:[%s10 + $0x278] sm:$0xff]
  %v1916 = vld [vmem:[%s10 + $0x280] sm:$0xff]
  %v1917 = vld [vmem:[%s10 + $0x288] sm:$0xff]
  %v1918 = vld [vmem:[%s10 + $0x290] sm:$0xff]
  %v1919 = vld [vmem:[%s10 + $0x298] sm:$0xff]
  %v1920 = vld [vmem:[%s10 + $0x2a0] sm:$0xff]
  %v1921 = vld [vmem:[%s10 + $0x2a8] sm:$0xff]
  %v1922 = vld [vmem:[%s10 + $0x2b0] sm:$0xff]
  %v1923 = vld [vmem:[%s10 + $0x2b8] sm:$0xff]
  %v1924 = vld [vmem:[%s10 + $0x2c0] sm:$0xff]
  %v1925 = vld [vmem:[%s10 + $0x2c8] sm:$0xff]
  %v1926 = vld [vmem:[%s10 + $0x2d0] sm:$0xff]
  %v1927 = vld [vmem:[%s10 + $0x2d8] sm:$0xff]
  %v1928 = vld [vmem:[%s10 + $0x2e0] sm:$0xff]
  %v1929 = vld [vmem:[%s10 + $0x2e8] sm:$0xff]
  %v1930 = vld [vmem:[%s10 + $0x2f0] sm:$0xff]
  %v1931 = vld [vmem:[%s10 + $0x2f8] sm:$0xff]
  %v1932 = vld [vmem:[%s11] sm:$0xff]
  %v1933 = vld [vmem:[%s11 + $0x8] sm:$0xff]
  %v1934 = vld [vmem:[%s11 + $0x10] sm:$0xff]
  %v1935 = vld [vmem:[%s11 + $0x18] sm:$0xff]
  %v1936 = vld [vmem:[%s11 + $0x20] sm:$0xff]
  %v1937 = vld [vmem:[%s11 + $0x28] sm:$0xff]
  %v1938 = vld [vmem:[%s11 + $0x30] sm:$0xff]
  %v1939 = vld [vmem:[%s11 + $0x38] sm:$0xff]
  %v1940 = vld [vmem:[%s11 + $0x40] sm:$0xff]
  %v1941 = vld [vmem:[%s11 + $0x48] sm:$0xff]
  %v1942 = vld [vmem:[%s11 + $0x50] sm:$0xff]
  %v1943 = vld [vmem:[%s11 + $0x58] sm:$0xff]
  %v1944 = vld [vmem:[%s11 + $0x60] sm:$0xff]
  %v1945 = vld [vmem:[%s11 + $0x68] sm:$0xff]
  %v1946 = vld [vmem:[%s11 + $0x70] sm:$0xff]
  %v1947 = vld [vmem:[%s11 + $0x78] sm:$0xff]
  %v1948 = vld [vmem:[%s11 + $0x80] sm:$0xff]
  %v1949 = vld [vmem:[%s11 + $0x88] sm:$0xff]
  %v1950 = vld [vmem:[%s11 + $0x90] sm:$0xff]
  %v1951 = vld [vmem:[%s11 + $0x98] sm:$0xff]
  %v1952 = vld [vmem:[%s11 + $0xa0] sm:$0xff]
  %v1953 = vld [vmem:[%s11 + $0xa8] sm:$0xff]
  %v1954 = vld [vmem:[%s11 + $0xb0] sm:$0xff]
  %v1955 = vld [vmem:[%s11 + $0xb8] sm:$0xff]
  %v1956 = vld [vmem:[%s11 + $0xc0] sm:$0xff]
  %v1957 = vld [vmem:[%s11 + $0xc8] sm:$0xff]
  %v1958 = vld [vmem:[%s11 + $0xd0] sm:$0xff]
  %v1959 = vld [vmem:[%s11 + $0xd8] sm:$0xff]
  %v1960 = vld [vmem:[%s11 + $0xe0] sm:$0xff]
  %v1961 = vld [vmem:[%s11 + $0xe8] sm:$0xff]
  %v1962 = vld [vmem:[%s11 + $0xf0] sm:$0xff]
  %v1963 = vld [vmem:[%s11 + $0xf8] sm:$0xff]
  %v1964 = vld [vmem:[%s11 + $0x100] sm:$0xff]
  %v1965 = vld [vmem:[%s11 + $0x108] sm:$0xff]
  %v1966 = vld [vmem:[%s11 + $0x110] sm:$0xff]
  %v1967 = vld [vmem:[%s11 + $0x118] sm:$0xff]
  %v1968 = vld [vmem:[%s11 + $0x120] sm:$0xff]
  %v1969 = vld [vmem:[%s11 + $0x128] sm:$0xff]
  %v1970 = vld [vmem:[%s11 + $0x130] sm:$0xff]
  %v1971 = vld [vmem:[%s11 + $0x138] sm:$0xff]
  %v1972 = vld [vmem:[%s11 + $0x140] sm:$0xff]
  %v1973 = vld [vmem:[%s11 + $0x148] sm:$0xff]
  %v1974 = vld [vmem:[%s11 + $0x150] sm:$0xff]
  %v1975 = vld [vmem:[%s11 + $0x158] sm:$0xff]
  %v1976 = vld [vmem:[%s11 + $0x160] sm:$0xff]
  %v1977 = vld [vmem:[%s11 + $0x168] sm:$0xff]
  %v1978 = vld [vmem:[%s11 + $0x170] sm:$0xff]
  %v1979 = vld [vmem:[%s11 + $0x178] sm:$0xff]
  %v1980 = vld [vmem:[%s11 + $0x180] sm:$0xff]
  %v1981 = vld [vmem:[%s11 + $0x188] sm:$0xff]
  %v1982 = vld [vmem:[%s11 + $0x190] sm:$0xff]
  %v1983 = vld [vmem:[%s11 + $0x198] sm:$0xff]
  %v1984 = vld [vmem:[%s11 + $0x1a0] sm:$0xff]
  %v1985 = vld [vmem:[%s11 + $0x1a8] sm:$0xff]
  %v1986 = vld [vmem:[%s11 + $0x1b0] sm:$0xff]
  %v1987 = vld [vmem:[%s11 + $0x1b8] sm:$0xff]
  %v1988 = vld [vmem:[%s11 + $0x1c0] sm:$0xff]
  %v1989 = vld [vmem:[%s11 + $0x1c8] sm:$0xff]
  %v1990 = vld [vmem:[%s11 + $0x1d0] sm:$0xff]
  %v1991 = vld [vmem:[%s11 + $0x1d8] sm:$0xff]
  %v1992 = vld [vmem:[%s11 + $0x1e0] sm:$0xff]
  %v1993 = vld [vmem:[%s11 + $0x1e8] sm:$0xff]
  %v1994 = vld [vmem:[%s11 + $0x1f0] sm:$0xff]
  %v1995 = vld [vmem:[%s11 + $0x1f8] sm:$0xff]
  %v1996 = vld [vmem:[%s11 + $0x200] sm:$0xff]
  %v1997 = vld [vmem:[%s11 + $0x208] sm:$0xff]
  %v1998 = vld [vmem:[%s11 + $0x210] sm:$0xff]
  %v1999 = vld [vmem:[%s11 + $0x218] sm:$0xff]
  %v2000 = vld [vmem:[%s11 + $0x220] sm:$0xff]
  %v2001 = vld [vmem:[%s11 + $0x228] sm:$0xff]
  %v2002 = vld [vmem:[%s11 + $0x230] sm:$0xff]
  %v2003 = vld [vmem:[%s11 + $0x238] sm:$0xff]
  %v2004 = vld [vmem:[%s11 + $0x240] sm:$0xff]
  %v2005 = vld [vmem:[%s11 + $0x248] sm:$0xff]
  %v2006 = vld [vmem:[%s11 + $0x250] sm:$0xff]
  %v2007 = vld [vmem:[%s11 + $0x258] sm:$0xff]
  %v2008 = vld [vmem:[%s11 + $0x260] sm:$0xff]
  %v2009 = vld [vmem:[%s11 + $0x268] sm:$0xff]
  %v2010 = vld [vmem:[%s11 + $0x270] sm:$0xff]
  %v2011 = vld [vmem:[%s11 + $0x278] sm:$0xff]
  %v2012 = vld [vmem:[%s11 + $0x280] sm:$0xff]
  %v2013 = vld [vmem:[%s11 + $0x288] sm:$0xff]
  %v2014 = vld [vmem:[%s11 + $0x290] sm:$0xff]
  %v2015 = vld [vmem:[%s11 + $0x298] sm:$0xff]
  %v2016 = vld [vmem:[%s11 + $0x2a0] sm:$0xff]
  %v2017 = vld [vmem:[%s11 + $0x2a8] sm:$0xff]
  %v2018 = vld [vmem:[%s11 + $0x2b0] sm:$0xff]
  %v2019 = vld [vmem:[%s11 + $0x2b8] sm:$0xff]
  %v2020 = vld [vmem:[%s11 + $0x2c0] sm:$0xff]
  %v2021 = vld [vmem:[%s11 + $0x2c8] sm:$0xff]
  %v2022 = vld [vmem:[%s11 + $0x2d0] sm:$0xff]
  %v2023 = vld [vmem:[%s11 + $0x2d8] sm:$0xff]
  %v2024 = vld [vmem:[%s11 + $0x2e0] sm:$0xff]
  %v2025 = vld [vmem:[%s11 + $0x2e8] sm:$0xff]
  %v2026 = vld [vmem:[%s11 + $0x2f0] sm:$0xff]
  %v2027 = vld [vmem:[%s11 + $0x2f8] sm:$0xff]
  %2028 = vmatpush.msra.mxu0 %v1947
  %2029 = vmatpush.msra.mxu0 %v1946
  %2030 = vmatpush.msra.mxu0 %v1945
  %2031 = vmatpush.msra.mxu0 %v1944
  %2032 = vmatpush.msra.mxu0 %v1943
  %2033 = vmatpush.msra.mxu0 %v1942
  %2034 = vmatpush.msra.mxu0 %v1941
  %2035 = vmatpush.msra.mxu0 %v1940
  %2036 = vmatpush.msra.mxu0 %v1939
  %2037 = vmatpush.msra.mxu0 %v1938
  %2038 = vmatpush.msra.mxu0 %v1937
  %2039 = vmatpush.msra.mxu0 %v1936
  %2040 = vmatpush.msra.mxu0 %v1935
  %2041 = vmatpush.msra.mxu0 %v1934
  %2042 = vmatpush.msra.mxu0 %v1933
  %2043 = vmatpush.msra.mxu0 %v1932
  %2044 = vmatmul.f32.gmra.mxu0 %v1830
  %v2045 = vpop.f32.mrf.mxu0
  %v2046 = vadd.f32 0.0, %v2045
  %2047 = vdwg.mxu0
  %2048 = vmatpush.msra.mxu0 %v1963
  %2049 = vmatpush.msra.mxu0 %v1962
  %2050 = vmatpush.msra.mxu0 %v1961
  %2051 = vmatpush.msra.mxu0 %v1960
  %2052 = vmatpush.msra.mxu0 %v1959
  %2053 = vmatpush.msra.mxu0 %v1958
  %2054 = vmatpush.msra.mxu0 %v1957
  %2055 = vmatpush.msra.mxu0 %v1956
  %2056 = vmatpush.msra.mxu0 %v1955
  %2057 = vmatpush.msra.mxu0 %v1954
  %2058 = vmatpush.msra.mxu0 %v1953
  %2059 = vmatpush.msra.mxu0 %v1952
  %2060 = vmatpush.msra.mxu0 %v1951
  %2061 = vmatpush.msra.mxu0 %v1950
  %2062 = vmatpush.msra.mxu0 %v1949
  %2063 = vmatpush.msra.mxu0 %v1948
  %2064 = vmatmul.f32.gmra.mxu0 %v1831
  %v2065 = vpop.f32.mrf.mxu0
  %v2066 = vadd.f32 %v2046, %v2065
  %2067 = vdwg.mxu0
  %2068 = vmatpush.msra.mxu0 %v1979
  %2069 = vmatpush.msra.mxu0 %v1978
  %2070 = vmatpush.msra.mxu0 %v1977
  %2071 = vmatpush.msra.mxu0 %v1976
  %2072 = vmatpush.msra.mxu0 %v1975
  %2073 = vmatpush.msra.mxu0 %v1974
  %2074 = vmatpush.msra.mxu0 %v1973
  %2075 = vmatpush.msra.mxu0 %v1972
  %2076 = vmatpush.msra.mxu0 %v1971
  %2077 = vmatpush.msra.mxu0 %v1970
  %2078 = vmatpush.msra.mxu0 %v1969
  %2079 = vmatpush.msra.mxu0 %v1968
  %2080 = vmatpush.msra.mxu0 %v1967
  %2081 = vmatpush.msra.mxu0 %v1966
  %2082 = vmatpush.msra.mxu0 %v1965
  %2083 = vmatpush.msra.mxu0 %v1964
  %2084 = vmatmul.f32.gmra.mxu0 %v1832
  %v2085 = vpop.f32.mrf.mxu0
  %v2086 = vadd.f32 %v2066, %v2085
  %2087 = vdwg.mxu0
  %2088 = vmatpush.msra.mxu0 %v1995
  %2089 = vmatpush.msra.mxu0 %v1994
  %2090 = vmatpush.msra.mxu0 %v1993
  %2091 = vmatpush.msra.mxu0 %v1992
  %2092 = vmatpush.msra.mxu0 %v1991
  %2093 = vmatpush.msra.mxu0 %v1990
  %2094 = vmatpush.msra.mxu0 %v1989
  %2095 = vmatpush.msra.mxu0 %v1988
  %2096 = vmatpush.msra.mxu0 %v1987
  %2097 = vmatpush.msra.mxu0 %v1986
  %2098 = vmatpush.msra.mxu0 %v1985
  %2099 = vmatpush.msra.mxu0 %v1984
  %2100 = vmatpush.msra.mxu0 %v1983
  %2101 = vmatpush.msra.mxu0 %v1982
  %2102 = vmatpush.msra.mxu0 %v1981
  %2103 = vmatpush.msra.mxu0 %v1980
  %2104 = vmatmul.f32.gmra.mxu0 %v1833
  %v2105 = vpop.f32.mrf.mxu0
  %v2106 = vadd.f32 %v2086, %v2105
  %2107 = vdwg.mxu0
  %2108 = vmatpush.msra.mxu0 %v2011
  %2109 = vmatpush.msra.mxu0 %v2010
  %2110 = vmatpush.msra.mxu0 %v2009
  %2111 = vmatpush.msra.mxu0 %v2008
  %2112 = vmatpush.msra.mxu0 %v2007
  %2113 = vmatpush.msra.mxu0 %v2006
  %2114 = vmatpush.msra.mxu0 %v2005
  %2115 = vmatpush.msra.mxu0 %v2004
  %2116 = vmatpush.msra.mxu0 %v2003
  %2117 = vmatpush.msra.mxu0 %v2002
  %2118 = vmatpush.msra.mxu0 %v2001
  %2119 = vmatpush.msra.mxu0 %v2000
  %2120 = vmatpush.msra.mxu0 %v1999
  %2121 = vmatpush.msra.mxu0 %v1998
  %2122 = vmatpush.msra.mxu0 %v1997
  %2123 = vmatpush.msra.mxu0 %v1996
  %2124 = vmatmul.f32.gmra.mxu0 %v1834
  %v2125 = vpop.f32.mrf.mxu0
  %v2126 = vadd.f32 %v2106, %v2125
  %2127 = vdwg.mxu0
  %2128 = vmatpush.msra.mxu0 %v2027
  %2129 = vmatpush.msra.mxu0 %v2026
  %2130 = vmatpush.msra.mxu0 %v2025
  %2131 = vmatpush.msra.mxu0 %v2024
  %2132 = vmatpush.msra.mxu0 %v2023
  %2133 = vmatpush.msra.mxu0 %v2022
  %2134 = vmatpush.msra.mxu0 %v2021
  %2135 = vmatpush.msra.mxu0 %v2020
  %2136 = vmatpush.msra.mxu0 %v2019
  %2137 = vmatpush.msra.mxu0 %v2018
  %2138 = vmatpush.msra.mxu0 %v2017
  %2139 = vmatpush.msra.mxu0 %v2016
  %2140 = vmatpush.msra.mxu0 %v2015
  %2141 = vmatpush.msra.mxu0 %v2014
  %2142 = vmatpush.msra.mxu0 %v2013
  %2143 = vmatpush.msra.mxu0 %v2012
  %2144 = vmatmul.f32.gmra.mxu0 %v1835
  %v2145 = vpop.f32.mrf.mxu0
  %v2146 = vadd.f32 %v2126, %v2145
  %2147 = vdwg.mxu0
  %2148 = vmatpush.msra.mxu0 %v1851
  %2149 = vmatpush.msra.mxu0 %v1850
  %2150 = vmatpush.msra.mxu0 %v1849
  %2151 = vmatpush.msra.mxu0 %v1848
  %2152 = vmatpush.msra.mxu0 %v1847
  %2153 = vmatpush.msra.mxu0 %v1846
  %2154 = vmatpush.msra.mxu0 %v1845
  %2155 = vmatpush.msra.mxu0 %v1844
  %2156 = vmatpush.msra.mxu0 %v1843
  %2157 = vmatpush.msra.mxu0 %v1842
  %2158 = vmatpush.msra.mxu0 %v1841
  %2159 = vmatpush.msra.mxu0 %v1840
  %2160 = vmatpush.msra.mxu0 %v1839
  %2161 = vmatpush.msra.mxu0 %v1838
  %2162 = vmatpush.msra.mxu0 %v1837
  %2163 = vmatpush.msra.mxu0 %v1836
  %2164 = vmatmul.f32.gmra.mxu0 %v1760
  %v2165 = vpop.f32.mrf.mxu0
  %v2166 = vadd.f32 %v2146, %v2165
  %2167 = vdwg.mxu0
  %2168 = vmatpush.msra.mxu0 %v1867
  %2169 = vmatpush.msra.mxu0 %v1866
  %2170 = vmatpush.msra.mxu0 %v1865
  %2171 = vmatpush.msra.mxu0 %v1864
  %2172 = vmatpush.msra.mxu0 %v1863
  %2173 = vmatpush.msra.mxu0 %v1862
  %2174 = vmatpush.msra.mxu0 %v1861
  %2175 = vmatpush.msra.mxu0 %v1860
  %2176 = vmatpush.msra.mxu0 %v1859
  %2177 = vmatpush.msra.mxu0 %v1858
  %2178 = vmatpush.msra.mxu0 %v1857
  %2179 = vmatpush.msra.mxu0 %v1856
  %2180 = vmatpush.msra.mxu0 %v1855
  %2181 = vmatpush.msra.mxu0 %v1854
  %2182 = vmatpush.msra.mxu0 %v1853
  %2183 = vmatpush.msra.mxu0 %v1852
  %2184 = vmatmul.f32.gmra.mxu0 %v1761
  %v2185 = vpop.f32.mrf.mxu0
  %v2186 = vadd.f32 %v2166, %v2185
  %2187 = vdwg.mxu0
  %2188 = vmatpush.msra.mxu0 %v1883
  %2189 = vmatpush.msra.mxu0 %v1882
  %2190 = vmatpush.msra.mxu0 %v1881
  %2191 = vmatpush.msra.mxu0 %v1880
  %2192 = vmatpush.msra.mxu0 %v1879
  %2193 = vmatpush.msra.mxu0 %v1878
  %2194 = vmatpush.msra.mxu0 %v1877
  %2195 = vmatpush.msra.mxu0 %v1876
  %2196 = vmatpush.msra.mxu0 %v1875
  %2197 = vmatpush.msra.mxu0 %v1874
  %2198 = vmatpush.msra.mxu0 %v1873
  %2199 = vmatpush.msra.mxu0 %v1872
  %2200 = vmatpush.msra.mxu0 %v1871
  %2201 = vmatpush.msra.mxu0 %v1870
  %2202 = vmatpush.msra.mxu0 %v1869
  %2203 = vmatpush.msra.mxu0 %v1868
  %2204 = vmatmul.f32.gmra.mxu0 %v1762
  %v2205 = vpop.f32.mrf.mxu0
  %v2206 = vadd.f32 %v2186, %v2205
  %2207 = vdwg.mxu0
  %2208 = vmatpush.msra.mxu0 %v1899
  %2209 = vmatpush.msra.mxu0 %v1898
  %2210 = vmatpush.msra.mxu0 %v1897
  %2211 = vmatpush.msra.mxu0 %v1896
  %2212 = vmatpush.msra.mxu0 %v1895
  %2213 = vmatpush.msra.mxu0 %v1894
  %2214 = vmatpush.msra.mxu0 %v1893
  %2215 = vmatpush.msra.mxu0 %v1892
  %2216 = vmatpush.msra.mxu0 %v1891
  %2217 = vmatpush.msra.mxu0 %v1890
  %2218 = vmatpush.msra.mxu0 %v1889
  %2219 = vmatpush.msra.mxu0 %v1888
  %2220 = vmatpush.msra.mxu0 %v1887
  %2221 = vmatpush.msra.mxu0 %v1886
  %2222 = vmatpush.msra.mxu0 %v1885
  %2223 = vmatpush.msra.mxu0 %v1884
  %2224 = vmatmul.f32.gmra.mxu0 %v1763
  %v2225 = vpop.f32.mrf.mxu0
  %v2226 = vadd.f32 %v2206, %v2225
  %2227 = vdwg.mxu0
  %2228 = vmatpush.msra.mxu0 %v1915
  %2229 = vmatpush.msra.mxu0 %v1914
  %2230 = vmatpush.msra.mxu0 %v1913
  %2231 = vmatpush.msra.mxu0 %v1912
  %2232 = vmatpush.msra.mxu0 %v1911
  %2233 = vmatpush.msra.mxu0 %v1910
  %2234 = vmatpush.msra.mxu0 %v1909
  %2235 = vmatpush.msra.mxu0 %v1908
  %2236 = vmatpush.msra.mxu0 %v1907
  %2237 = vmatpush.msra.mxu0 %v1906
  %2238 = vmatpush.msra.mxu0 %v1905
  %2239 = vmatpush.msra.mxu0 %v1904
  %2240 = vmatpush.msra.mxu0 %v1903
  %2241 = vmatpush.msra.mxu0 %v1902
  %2242 = vmatpush.msra.mxu0 %v1901
  %2243 = vmatpush.msra.mxu0 %v1900
  %2244 = vmatmul.f32.gmra.mxu0 %v1764
  %v2245 = vpop.f32.mrf.mxu0
  %v2246 = vadd.f32 %v2226, %v2245
  %2247 = vdwg.mxu0
  %2248 = vmatpush.msra.mxu0 %v1931
  %2249 = vmatpush.msra.mxu0 %v1930
  %2250 = vmatpush.msra.mxu0 %v1929
  %2251 = vmatpush.msra.mxu0 %v1928
  %2252 = vmatpush.msra.mxu0 %v1927
  %2253 = vmatpush.msra.mxu0 %v1926
  %2254 = vmatpush.msra.mxu0 %v1925
  %2255 = vmatpush.msra.mxu0 %v1924
  %2256 = vmatpush.msra.mxu0 %v1923
  %2257 = vmatpush.msra.mxu0 %v1922
  %2258 = vmatpush.msra.mxu0 %v1921
  %2259 = vmatpush.msra.mxu0 %v1920
  %2260 = vmatpush.msra.mxu0 %v1919
  %2261 = vmatpush.msra.mxu0 %v1918
  %2262 = vmatpush.msra.mxu0 %v1917
  %2263 = vmatpush.msra.mxu0 %v1916
  %2264 = vmatmul.f32.gmra.mxu0 %v1765
  %v2265 = vpop.f32.mrf.mxu0
  %v2266 = vadd.f32 %v2246, %v2265
  %2267 = vdwg.mxu0
  %v2268 = vld [vmem:[%s12] sm:$0x1]
  %v2270 = vperm.slane %v2268, 0
  %v2272 = vadd.f32 %v2266, %v2270
  %v2273 = vmax.f32 %v2272, 0.0
  %vm2274 = vcmask 257024
  %v2275 = vsel %vm2274, %v2273, 0.0
  %2276 = vadd.xlane.f32.xlu0 %v2275
  %v2277 = vpop.xlane.xlu0 %2276
  %v2278 = vrot.slane %v2277, 4
  %v2279 = vadd.f32 %v2277, %v2278
  %v2280 = vrot.slane %v2279, 2
  %v2281 = vadd.f32 %v2279, %v2280
  %v2282 = vrot.slane %v2281, 1
  %v2283 = vadd.f32 %v2281, %v2282
  %s2284 = vtos %v2283
  %v2285 = vrcp.pop 128.0
  %v2286 = vmul.f32 128.0, %v2285
  %v2287 = vsub.f32 1.0, %v2286
  %v2288 = vmul.f32 %v2285, %v2287
  %v2289 = vadd.f32 %v2285, %v2288
  %vm2290 = vweird.f32 %v2285
  %v2291 = vsel %vm2290, %v2285, %v2289
  %s2292 = vtos %v2291
  %s2293 = smul.f32 %s2284, %s2292
  %v2294 = vmul.f32 %v2273, %v2273
  %v2295 = vsel %vm2274, %v2294, 0.0
  %2296 = vadd.xlane.f32.xlu0 %v2295
  %v2297 = vpop.xlane.xlu0 %2296
  %v2298 = vrot.slane %v2297, 4
  %v2299 = vadd.f32 %v2297, %v2298
  %v2300 = vrot.slane %v2299, 2
  %v2301 = vadd.f32 %v2299, %v2300
  %v2302 = vrot.slane %v2301, 1
  %v2303 = vadd.f32 %v2301, %v2302
  %s2304 = vtos %v2303
  %v2305 = vrcp.pop 128.0
  %v2306 = vmul.f32 128.0, %v2305
  %v2307 = vsub.f32 1.0, %v2306
  %v2308 = vmul.f32 %v2305, %v2307
  %v2309 = vadd.f32 %v2305, %v2308
  %vm2310 = vweird.f32 %v2305
  %v2311 = vsel %vm2310, %v2305, %v2309
  %s2312 = vtos %v2311
  %s2313 = smul.f32 %s2304, %s2312
  %s2314 = smul.f32 %s2293, %s2293
  %s2315 = ssub.f32 %s2313, %s2314
  %v2316 = vstv %s2293
  %v2317 = vsub.f32 %v2273, %v2316
  %s2318 = sadd.f32 %s2315, 1e-05
  %v2319 = vstv %s2318
  %v2320 = vrsqrt.pop %v2319
  %v2321 = vmul.f32 %v2320, %v2319
  %v2322 = vmul.f32 %v2321, %v2320
  %v2323 = vmul.f32 0.5, %v2322
  %v2324 = vsub.f32 1.5, %v2323
  %v2325 = vmul.f32 %v2320, %v2324
  %vm2326 = vweird.f32 %v2319
  %vm2327 = vweird.f32 %v2320
  %vm2328 = vmor %vm2326, %vm2327
  %v2329 = vsel %vm2328, %v2320, %v2325
  %s2330 = vtos %v2329
  %v2331 = vstv %s2330
  %v2332 = vmul.f32 %v2317, %v2331
  %v2333 = vld [vmem:[%s13] sm:$0xf]
  %v2334 = vmul.f32 %v2332, %v2333
  %v2335 = vld [vmem:[%s14] sm:$0xf]
  %v2336 = vadd.f32 %v2334, %v2335
  %v2337 = vld [vmem:[%s15] sm:$0x1]
  %v2339 = vperm.slane %v2337, 0
  %v2341 = vmul.f32 %v2336, %v2339
  %v2342 = vsel %vm2274, %v2341, 0.0
  %2343 = vadd.xlane.f32.xlu0 %v2342
  %v2344 = vpop.xlane.xlu0 %2343
  %v2345 = vld [vmem:[#allocation2] sm:$0x1]
  %v2347 = vperm.slane %v2345, 0
  %v2349 = vadd.f32 %v2344, %v2347
  %v2350 = vtanh.pop %v2349
  %v2351 = vmul.f32 %v2350, 2.5
  %2353 = vset.pattern.permute.xlu0 0
  %2354 = vperm.xlu0 %2353, %v2351
  %v2355 = vpop.permute.xlu0 %2354
  %2357 = vst [vmem:[%s17] sm:$0xf] %v2355
  // Predicated region
  $region70: #{custom_multi_model_simple_pooled.1} parent=0 // pred_check
    _
  $region71: #{custom_multi_model_simple_pooled.1} parent=0 // pred_check_branch
    %2359 = sbr.rel (0) target = $region73
  $region72: #{custom_multi_model_simple_pooled.1} parent=0 // pred_region
    _
  $region73: #{custom_multi_model_simple_pooled.1} parent=0 // pred_fallthru
    _
  // Predicated region
  $region74: #{custom_multi_model_simple_pooled.1} parent=0 // pred_check
    _
  $region75: #{custom_multi_model_simple_pooled.1} parent=0 // pred_check_branch
    %2361 = sbr.rel (0) target = $region77
  $region76: #{custom_multi_model_simple_pooled.1} parent=0 // pred_region
    _
  $region77: #{custom_multi_model_simple_pooled.1} parent=0 // pred_fallthru
    _

</llo_original>
